<compile_context>
chip_gen: v7x
topology: tpu7x:2x2x1
jax: 0.10.0
libtpu: 0.0.40
codegen_flags: <defaults>
</compile_context>

<pallas_src>
import functools

import numpy as np
import jax
import jax.numpy as jnp
from jax.experimental import pallas as pl
from jax.experimental.pallas import tpu as pltpu


def mha_kernel(q_ref, k_ref, v_ref,
               wq_ref, bq_ref, wk_ref, bk_ref, wv_ref, bv_ref,
               wo_ref, bo_ref, g_ref, beta_ref,
               out_ref,
               *, H, d_k, d_v, d_model, compute_dtype, approx_recip):
    d_pad = out_ref.shape[-1]           # lane-padded model dim (multiple of 128)
    tq = q_ref.shape[0]                 # query rows of this tile (one batch element)
    Sk = k_ref.shape[0]                 # full key/value length of this batch element
    cd = compute_dtype

    xq = q_ref[...]                     # (tq, d_pad)
    xk = k_ref[...]                     # (Sk, d_pad)
    xv = v_ref[...]                     # (Sk, d_pad)

    # ---- fused Q/K/V projections: one lane-dense MXU matmul + one bias add each ----
    qp = jnp.dot(xq.astype(cd), wq_ref[...].astype(cd),
                 preferred_element_type=jnp.float32) + bq_ref[...]    # (tq, H*d_k)
    kp = jnp.dot(xk.astype(cd), wk_ref[...].astype(cd),
                 preferred_element_type=jnp.float32) + bk_ref[...]    # (Sk, H*d_k)
    vp = jnp.dot(xv.astype(cd), wv_ref[...].astype(cd),
                 preferred_element_type=jnp.float32) + bv_ref[...]    # (Sk, H*d_v)

    # ---- head split to leading-batch layout (no concatenates) ----
    qh = jnp.transpose(qp.reshape(tq, H, d_k), (1, 0, 2))             # (H, tq, d_k)
    kh = jnp.transpose(kp.reshape(Sk, H, d_k), (1, 0, 2))             # (H, Sk, d_k)
    vh = jnp.transpose(vp.reshape(Sk, H, d_v), (1, 0, 2))             # (H, Sk, d_v)

    # ---- scaled dot-product attention, batched over heads ----
    # TODO(synk): tile kv with online-softmax accumulators for very long Sk (flash-style).
    scale = 1.0 / float(np.sqrt(d_k))
    scores = jnp.einsum("hqd,hkd->hqk", qh.astype(cd), kh.astype(cd),
                        preferred_element_type=jnp.float32) * scale   # (H, tq, Sk)
    scores = scores - jnp.max(scores, axis=-1, keepdims=True)
    p = jnp.exp(scores)
    denom = jnp.sum(p, axis=-1, keepdims=True)
    p = p * pl.reciprocal(denom, approx=approx_recip)                 # EUP vrcp when approx
    ctx = jnp.einsum("hqk,hkd->hqd", p.astype(cd), vh.astype(cd),
                     preferred_element_type=jnp.float32)              # (H, tq, d_v)

    # ---- output projection: single matmul over the full H*d_v contraction ----
    ctx2 = jnp.transpose(ctx, (1, 0, 2)).reshape(tq, H * d_v)         # (tq, H*d_v)
    attn = jnp.dot(ctx2.astype(cd), wo_ref[...].astype(cd),
                   preferred_element_type=jnp.float32) + bo_ref[...]  # (tq, d_pad)

    # ---- residual + LayerNorm over the true d_model lanes (pad lanes are exact zeros) ----
    y = attn + xq.astype(jnp.float32)
    inv_d = 1.0 / float(d_model)
    mean = jnp.sum(y, axis=-1, keepdims=True) * inv_d                 # pad lanes are 0
    centered = y - mean
    if d_pad != d_model:                                              # mask pad lanes for var
        lane = jax.lax.broadcasted_iota(jnp.int32, y.shape, 1)
        centered = jnp.where(lane < d_model, centered, 0.0)
    var = jnp.sum(centered * centered, axis=-1, keepdims=True) * inv_d
    y = centered * jax.lax.rsqrt(var + 1e-5)
    y = y * g_ref[...] + beta_ref[...]                                # pad g/beta = 0 -> pad out = 0

    out_ref[...] = y.astype(out_ref.dtype)                            # lane-dense store


def _round_up(x, m):
    return ((x + m - 1) // m) * m


def multi_head_attention_pallas(Q, K, V, params, *, n_heads, d_k, d_v,
                                compute_dtype=jnp.float32,
                                approx_recip=True,
                                q_tile=256):
    B, Sq, d_model = Q.shape
    Sk = K.shape[1]
    assert Sq % 8 == 0 and Sk % 8 == 0, "sequence lengths must be sublane (8) aligned"

    # ---- lane-dense padding of the model dim (free wrapper-side; zeros keep math exact) ----
    d_pad = d_model if d_model % 128 == 0 else _round_up(d_model, 128)
    pad = d_pad - d_model

    def pad_last(a):
        return jnp.pad(a, [(0, 0)] * (a.ndim - 1) + [(0, pad)]) if pad else a

    def pad_rows(a):
        return jnp.pad(a, ((0, pad), (0, 0))) if pad else a

    q2 = pad_last(Q).reshape(B * Sq, d_pad)
    k2 = pad_last(K).reshape(B * Sk, d_pad)
    v2 = pad_last(V).reshape(B * Sk, d_pad)

    wq = pad_rows(params["wq"]); wk = pad_rows(params["wk"]); wv = pad_rows(params["wv"])
    wo = pad_last(params["wo"]); bo = pad_last(params["bo"])
    g = pad_last(params["ln_g"]); beta = pad_last(params["ln_b"])

    args = (q2, k2, v2,
            wq, params["bq"], wk, params["bk"], wv, params["bv"],
            wo, bo, g, beta)

    # ---- grid: (batch, q-row tile); weights are constant-index resident blocks ----
    tq = q_tile if (Sq % q_tile == 0) else Sq
    n_q = Sq // tq
    grid = (B, n_q)

    q_map = lambda b, qi: (b * n_q + qi, 0)
    kv_map = lambda b, qi: (b, 0)
    w_map = lambda b, qi: (0, 0)

    in_specs = [
        pl.BlockSpec((tq, d_pad), q_map),
        pl.BlockSpec((Sk, d_pad), kv_map),
        pl.BlockSpec((Sk, d_pad), kv_map),
        pl.BlockSpec(wq.shape, w_map),
        pl.BlockSpec(params["bq"].shape, w_map),
        pl.BlockSpec(wk.shape, w_map),
        pl.BlockSpec(params["bk"].shape, w_map),
        pl.BlockSpec(wv.shape, w_map),
        pl.BlockSpec(params["bv"].shape, w_map),
        pl.BlockSpec(wo.shape, w_map),
        pl.BlockSpec(bo.shape, w_map),
        pl.BlockSpec(g.shape, w_map),
        pl.BlockSpec(beta.shape, w_map),
    ]
    out_spec = pl.BlockSpec((tq, d_pad), q_map)

    flops = (2 * (B * Sq) * d_pad * (n_heads * d_k)        # Q projection
             + 2 * (B * Sk) * d_pad * (n_heads * d_k)      # K projection
             + 2 * (B * Sk) * d_pad * (n_heads * d_v)      # V projection
             + 2 * n_heads * B * Sq * Sk * (d_k + d_v)     # scores + context
             + 2 * (B * Sq) * (n_heads * d_v) * d_pad)     # output projection
    transcendentals = n_heads * B * Sq * Sk                # exp in softmax
    bytes_accessed = 4 * (sum(int(np.prod(a.shape)) for a in args) + B * Sq * d_pad)

    kernel = functools.partial(mha_kernel, H=n_heads, d_k=d_k, d_v=d_v,
                               d_model=d_model, compute_dtype=compute_dtype,
                               approx_recip=approx_recip)

    out2 = pl.pallas_call(
        kernel,
        out_shape=jax.ShapeDtypeStruct((B * Sq, d_pad), Q.dtype),
        grid_spec=pl.GridSpec(grid=grid, in_specs=in_specs, out_specs=out_spec),
        compiler_params=pltpu.CompilerParams(
            dimension_semantics=("parallel", "parallel"),   # independent tiles; v7x 2-TC sharding
            vmem_limit_bytes=48 * 1024 * 1024,              # explicit scoped-VMEM budget
        ),
        cost_estimate=pl.CostEstimate(flops=flops,
                                      transcendentals=transcendentals,
                                      bytes_accessed=bytes_accessed),
    )(*args)

    out = out2[:, :d_model] if pad else out2
    return out.reshape(B, Sq, d_model)


def multi_head_attention_ref(Q, K, V, params, *, n_heads, d_k, d_v):
    """Pure-JAX reference mirroring the PyTorch MultiHeadAttention exactly."""
    B, Sq, d_model = Q.shape
    Sk = K.shape[1]
    q = Q @ params["wq"] + params["bq"]
    k = K @ params["wk"] + params["bk"]
    v = V @ params["wv"] + params["bv"]
    q = q.reshape(B, Sq, n_heads, d_k).transpose(0, 2, 1, 3)
    k = k.reshape(B, Sk, n_heads, d_k).transpose(0, 2, 1, 3)
    v = v.reshape(B, Sk, n_heads, d_v).transpose(0, 2, 1, 3)
    scores = jnp.einsum("bhqd,bhkd->bhqk", q, k) / np.sqrt(d_k)
    attn = jax.nn.softmax(scores, axis=-1)
    ctx = jnp.einsum("bhqk,bhkd->bhqd", attn, v)
    ctx = ctx.transpose(0, 2, 1, 3).reshape(B, Sq, n_heads * d_v)
    out = ctx @ params["wo"] + params["bo"]
    y = out + Q
    mean = jnp.mean(y, axis=-1, keepdims=True)
    var = jnp.mean((y - mean) ** 2, axis=-1, keepdims=True)
    return (y - mean) / jnp.sqrt(var + 1e-5) * params["ln_g"] + params["ln_b"]


if __name__ == "__main__":
    B, S = 2, 8
    d_model, d_k, d_v, n_heads = 32, 8, 8, 4

    key = jax.random.PRNGKey(0)
    keys = jax.random.split(key, 16)

    def init(k, shape, scale=0.1):
        return (scale * jax.random.normal(k, shape)).astype(jnp.float32)

    # Linear weights are passed pre-transposed as (in_features, out_features); biases as (1, out).
    params = {
        "wq": init(keys[0], (d_model, n_heads * d_k)),
        "bq": init(keys[1], (1, n_heads * d_k)),
        "wk": init(keys[2], (d_model, n_heads * d_k)),
        "bk": init(keys[3], (1, n_heads * d_k)),
        "wv": init(keys[4], (d_model, n_heads * d_v)),
        "bv": init(keys[5], (1, n_heads * d_v)),
        "wo": init(keys[6], (n_heads * d_v, d_model)),
        "bo": init(keys[7], (1, d_model)),
        "ln_g": jnp.ones((1, d_model), jnp.float32),    # nn.LayerNorm default weight
        "ln_b": jnp.zeros((1, d_model), jnp.float32),   # nn.LayerNorm default bias
    }

    Q = jax.random.normal(keys[8], (B, S, d_model), dtype=jnp.float32)
    K = jax.random.normal(keys[9], (B, S, d_model), dtype=jnp.float32)
    V = jax.random.normal(keys[10], (B, S, d_model), dtype=jnp.float32)

    out = multi_head_attention_pallas(Q, K, V, params, n_heads=n_heads, d_k=d_k, d_v=d_v)
    out = jax.block_until_ready(out)

    ref = multi_head_attention_ref(Q, K, V, params, n_heads=n_heads, d_k=d_k, d_v=d_v)
    # Tolerance loosened for the approximate (EUP) reciprocal in the softmax normalization.
    np.testing.assert_allclose(np.asarray(out), np.asarray(ref), rtol=1e-2, atol=1e-2)

    print("KERNEL_OK")
</pallas_src>

<mosaic_0001>
module attributes {stable_mosaic.version = 11 : i64} {
  func.func @mha_kernel(%arg0: i32, %arg1: i32, %arg2: memref<8x128xf32, #tpu.memory_space<vmem>>, %arg3: memref<8x128xf32, #tpu.memory_space<vmem>>, %arg4: memref<8x128xf32, #tpu.memory_space<vmem>>, %arg5: memref<128x32xf32, #tpu.memory_space<vmem>>, %arg6: memref<1x32xf32, #tpu.memory_space<vmem>>, %arg7: memref<128x32xf32, #tpu.memory_space<vmem>>, %arg8: memref<1x32xf32, #tpu.memory_space<vmem>>, %arg9: memref<128x32xf32, #tpu.memory_space<vmem>>, %arg10: memref<1x32xf32, #tpu.memory_space<vmem>>, %arg11: memref<32x128xf32, #tpu.memory_space<vmem>>, %arg12: memref<1x128xf32, #tpu.memory_space<vmem>>, %arg13: memref<1x128xf32, #tpu.memory_space<vmem>>, %arg14: memref<1x128xf32, #tpu.memory_space<vmem>>, %arg15: memref<8x128xf32, #tpu.memory_space<vmem>>) attributes {dimension_semantics = [#tpu.dimension_semantics<parallel>, #tpu.dimension_semantics<parallel>], iteration_bounds = array<i64: 2, 1>, scalar_prefetch = 0 : i64, scratch_operands = 0 : i64, tpu.core_type = #tpu.core_type<tc>, window_params = [{transform_indices = @transform_0, window_bounds = array<i64: 8, 128>}, {transform_indices = @transform_1, window_bounds = array<i64: 8, 128>}, {transform_indices = @transform_2, window_bounds = array<i64: 8, 128>}, {pipeline_mode = #tpu.pipeline_mode<synchronous>, transform_indices = @transform_3, window_bounds = array<i64: 128, 32>}, {pipeline_mode = #tpu.pipeline_mode<synchronous>, transform_indices = @transform_4, window_bounds = array<i64: 1, 32>}, {pipeline_mode = #tpu.pipeline_mode<synchronous>, transform_indices = @transform_5, window_bounds = array<i64: 128, 32>}, {pipeline_mode = #tpu.pipeline_mode<synchronous>, transform_indices = @transform_6, window_bounds = array<i64: 1, 32>}, {pipeline_mode = #tpu.pipeline_mode<synchronous>, transform_indices = @transform_7, window_bounds = array<i64: 128, 32>}, {pipeline_mode = #tpu.pipeline_mode<synchronous>, transform_indices = @transform_8, window_bounds = array<i64: 1, 32>}, {pipeline_mode = #tpu.pipeline_mode<synchronous>, transform_indices = @transform_9, window_bounds = array<i64: 32, 128>}, {pipeline_mode = #tpu.pipeline_mode<synchronous>, transform_indices = @transform_10, window_bounds = array<i64: 1, 128>}, {pipeline_mode = #tpu.pipeline_mode<synchronous>, transform_indices = @transform_11, window_bounds = array<i64: 1, 128>}, {pipeline_mode = #tpu.pipeline_mode<synchronous>, transform_indices = @transform_12, window_bounds = array<i64: 1, 128>}, {transform_indices = @transform_13, window_bounds = array<i64: 8, 128>}]} {
    %c0 = arith.constant 0 : index
    %c0_0 = arith.constant 0 : index
    %0 = vector.load %arg2[%c0, %c0_0] : memref<8x128xf32, #tpu.memory_space<vmem>>, vector<8x128xf32>
    %c0_1 = arith.constant 0 : index
    %c0_2 = arith.constant 0 : index
    %1 = vector.load %arg3[%c0_1, %c0_2] : memref<8x128xf32, #tpu.memory_space<vmem>>, vector<8x128xf32>
    %c0_3 = arith.constant 0 : index
    %c0_4 = arith.constant 0 : index
    %2 = vector.load %arg4[%c0_3, %c0_4] : memref<8x128xf32, #tpu.memory_space<vmem>>, vector<8x128xf32>
    %c0_5 = arith.constant 0 : index
    %c0_6 = arith.constant 0 : index
    %3 = vector.load %arg5[%c0_5, %c0_6] : memref<128x32xf32, #tpu.memory_space<vmem>>, vector<128x32xf32>
    %cst = arith.constant dense<0.000000e+00> : vector<8x32xf32>
    %4 = tpu.matmul %0, %3, %cst {dimension_numbers = #tpu.dot_dimension_numbers<[1], [0], [0], [1], [0, 0, 1, 1], [], []>} : vector<8x128xf32>, vector<128x32xf32>, vector<8x32xf32> -> vector<8x32xf32>
    %c0_7 = arith.constant 0 : index
    %c0_8 = arith.constant 0 : index
    %5 = vector.load %arg6[%c0_7, %c0_8] : memref<1x32xf32, #tpu.memory_space<vmem>>, vector<1x32xf32>
    %6 = vector.broadcast %5 : vector<1x32xf32> to vector<8x32xf32>
    %7 = arith.addf %4, %6 : vector<8x32xf32>
    %c0_9 = arith.constant 0 : index
    %c0_10 = arith.constant 0 : index
    %8 = vector.load %arg7[%c0_9, %c0_10] : memref<128x32xf32, #tpu.memory_space<vmem>>, vector<128x32xf32>
    %cst_11 = arith.constant dense<0.000000e+00> : vector<8x32xf32>
    %9 = tpu.matmul %1, %8, %cst_11 {dimension_numbers = #tpu.dot_dimension_numbers<[1], [0], [0], [1], [0, 0, 1, 1], [], []>} : vector<8x128xf32>, vector<128x32xf32>, vector<8x32xf32> -> vector<8x32xf32>
    %c0_12 = arith.constant 0 : index
    %c0_13 = arith.constant 0 : index
    %10 = vector.load %arg8[%c0_12, %c0_13] : memref<1x32xf32, #tpu.memory_space<vmem>>, vector<1x32xf32>
    %11 = vector.broadcast %10 : vector<1x32xf32> to vector<8x32xf32>
    %12 = arith.addf %9, %11 : vector<8x32xf32>
    %c0_14 = arith.constant 0 : index
    %c0_15 = arith.constant 0 : index
    %13 = vector.load %arg9[%c0_14, %c0_15] : memref<128x32xf32, #tpu.memory_space<vmem>>, vector<128x32xf32>
    %cst_16 = arith.constant dense<0.000000e+00> : vector<8x32xf32>
    %14 = tpu.matmul %2, %13, %cst_16 {dimension_numbers = #tpu.dot_dimension_numbers<[1], [0], [0], [1], [0, 0, 1, 1], [], []>} : vector<8x128xf32>, vector<128x32xf32>, vector<8x32xf32> -> vector<8x32xf32>
    %c0_17 = arith.constant 0 : index
    %c0_18 = arith.constant 0 : index
    %15 = vector.load %arg10[%c0_17, %c0_18] : memref<1x32xf32, #tpu.memory_space<vmem>>, vector<1x32xf32>
    %16 = vector.broadcast %15 : vector<1x32xf32> to vector<8x32xf32>
    %17 = arith.addf %14, %16 : vector<8x32xf32>
    %18 = vector.shape_cast %7 : vector<8x32xf32> to vector<8x4x8xf32>
    %19 = tpu.transpose %18, [1, 0, 2] : vector<8x4x8xf32> -> vector<4x8x8xf32>
    %20 = vector.shape_cast %12 : vector<8x32xf32> to vector<8x4x8xf32>
    %21 = tpu.transpose %20, [1, 0, 2] : vector<8x4x8xf32> -> vector<4x8x8xf32>
    %22 = vector.shape_cast %17 : vector<8x32xf32> to vector<8x4x8xf32>
    %23 = tpu.transpose %22, [1, 0, 2] : vector<8x4x8xf32> -> vector<4x8x8xf32>
    "tpu.trace_start"() <{level = 10 : i32, message = "hqd,hkd->hqk"}> : () -> ()
    %cst_19 = arith.constant dense<0.000000e+00> : vector<4x8x8xf32>
    %24 = tpu.matmul %19, %21, %cst_19 {dimension_numbers = #tpu.dot_dimension_numbers<[2], [2], [1], [1], [0, 0, 0, 1, 1, 1], [0], [0]>} : vector<4x8x8xf32>, vector<4x8x8xf32>, vector<4x8x8xf32> -> vector<4x8x8xf32>
    "tpu.trace_stop"() : () -> ()
    %cst_20 = arith.constant 0.353553385 : f32
    %25 = vector.broadcast %cst_20 : f32 to vector<4x8x8xf32>
    %26 = arith.mulf %24, %25 : vector<4x8x8xf32>
    %cst_21 = arith.constant dense<0xFF800000> : vector<4x8xf32>
    %27 = vector.multi_reduction <maximumf>, %26, %cst_21 [2] : vector<4x8x8xf32> to vector<4x8xf32>
    %28 = vector.shape_cast %27 : vector<4x8xf32> to vector<4x8x1xf32>
    %29 = vector.broadcast %28 : vector<4x8x1xf32> to vector<4x8x8xf32>
    %30 = arith.subf %26, %29 : vector<4x8x8xf32>
    %31 = math.exp %30 : vector<4x8x8xf32>
    %cst_22 = arith.constant dense<0.000000e+00> : vector<4x8xf32>
    %32 = vector.multi_reduction <add>, %31, %cst_22 [2] : vector<4x8x8xf32> to vector<4x8xf32>
    %33 = vector.shape_cast %32 : vector<4x8xf32> to vector<4x8x1xf32>
    %34 = tpu.reciprocal %33 {approx = true} : vector<4x8x1xf32> -> vector<4x8x1xf32>
    %35 = vector.broadcast %34 : vector<4x8x1xf32> to vector<4x8x8xf32>
    %36 = arith.mulf %31, %35 : vector<4x8x8xf32>
    "tpu.trace_start"() <{level = 10 : i32, message = "hqk,hkd->hqd"}> : () -> ()
    %cst_23 = arith.constant dense<0.000000e+00> : vector<4x8x8xf32>
    %37 = tpu.matmul %36, %23, %cst_23 {dimension_numbers = #tpu.dot_dimension_numbers<[2], [1], [1], [2], [0, 0, 0, 1, 1, 2], [0], [0]>} : vector<4x8x8xf32>, vector<4x8x8xf32>, vector<4x8x8xf32> -> vector<4x8x8xf32>
    "tpu.trace_stop"() : () -> ()
    %38 = tpu.transpose %37, [1, 0, 2] : vector<4x8x8xf32> -> vector<8x4x8xf32>
    %39 = vector.shape_cast %38 : vector<8x4x8xf32> to vector<8x32xf32>
    %c0_24 = arith.constant 0 : index
    %c0_25 = arith.constant 0 : index
    %40 = vector.load %arg11[%c0_24, %c0_25] : memref<32x128xf32, #tpu.memory_space<vmem>>, vector<32x128xf32>
    %cst_26 = arith.constant dense<0.000000e+00> : vector<8x128xf32>
    %41 = tpu.matmul %39, %40, %cst_26 {dimension_numbers = #tpu.dot_dimension_numbers<[1], [0], [0], [1], [0, 0, 1, 1], [], []>} : vector<8x32xf32>, vector<32x128xf32>, vector<8x128xf32> -> vector<8x128xf32>
    %c0_27 = arith.constant 0 : index
    %c0_28 = arith.constant 0 : index
    %42 = vector.load %arg12[%c0_27, %c0_28] : memref<1x128xf32, #tpu.memory_space<vmem>>, vector<1x128xf32>
    %43 = vector.broadcast %42 : vector<1x128xf32> to vector<8x128xf32>
    %44 = arith.addf %41, %43 : vector<8x128xf32>
    %45 = arith.addf %44, %0 : vector<8x128xf32>
    %cst_29 = arith.constant dense<0.000000e+00> : vector<8xf32>
    %46 = vector.multi_reduction <add>, %45, %cst_29 [1] : vector<8x128xf32> to vector<8xf32>
    %47 = vector.shape_cast %46 : vector<8xf32> to vector<8x1xf32>
    %cst_30 = arith.constant 3.125000e-02 : f32
    %48 = vector.broadcast %cst_30 : f32 to vector<8x1xf32>
    %49 = arith.mulf %47, %48 : vector<8x1xf32>
    %50 = vector.broadcast %49 : vector<8x1xf32> to vector<8x128xf32>
    %51 = arith.subf %45, %50 : vector<8x128xf32>
    %52 = tpu.iota {dimensions = array<i32: 1>} : vector<8x128xi32>
    %c32_i32 = arith.constant 32 : i32
    %53 = vector.broadcast %c32_i32 : i32 to vector<8x128xi32>
    %54 = arith.cmpi slt, %52, %53 : vector<8x128xi32>
    %cst_31 = arith.constant 0.000000e+00 : f32
    %55 = vector.broadcast %cst_31 : f32 to vector<8x128xf32>
    %56 = arith.select %54, %51, %55 : vector<8x128xi1>, vector<8x128xf32>
    %57 = arith.mulf %56, %56 : vector<8x128xf32>
    %cst_32 = arith.constant dense<0.000000e+00> : vector<8xf32>
    %58 = vector.multi_reduction <add>, %57, %cst_32 [1] : vector<8x128xf32> to vector<8xf32>
    %59 = vector.shape_cast %58 : vector<8xf32> to vector<8x1xf32>
    %cst_33 = arith.constant 3.125000e-02 : f32
    %60 = vector.broadcast %cst_33 : f32 to vector<8x1xf32>
    %61 = arith.mulf %59, %60 : vector<8x1xf32>
    %cst_34 = arith.constant 9.99999974E-6 : f32
    %62 = vector.broadcast %cst_34 : f32 to vector<8x1xf32>
    %63 = arith.addf %61, %62 : vector<8x1xf32>
    %64 = math.rsqrt %63 : vector<8x1xf32>
    %65 = vector.broadcast %64 : vector<8x1xf32> to vector<8x128xf32>
    %66 = arith.mulf %56, %65 : vector<8x128xf32>
    %c0_35 = arith.constant 0 : index
    %c0_36 = arith.constant 0 : index
    %67 = vector.load %arg13[%c0_35, %c0_36] : memref<1x128xf32, #tpu.memory_space<vmem>>, vector<1x128xf32>
    %68 = vector.broadcast %67 : vector<1x128xf32> to vector<8x128xf32>
    %69 = arith.mulf %66, %68 : vector<8x128xf32>
    %c0_37 = arith.constant 0 : index
    %c0_38 = arith.constant 0 : index
    %70 = vector.load %arg14[%c0_37, %c0_38] : memref<1x128xf32, #tpu.memory_space<vmem>>, vector<1x128xf32>
    %71 = vector.broadcast %70 : vector<1x128xf32> to vector<8x128xf32>
    %72 = arith.addf %69, %71 : vector<8x128xf32>
    %c0_39 = arith.constant 0 : index
    %c0_40 = arith.constant 0 : index
    %73 = vector.load %arg15[%c0_39, %c0_40] : memref<8x128xf32, #tpu.memory_space<vmem>>, vector<8x128xf32>
    tpu.vector_store %arg15[%c0_39, %c0_40], %72 {strides = array<i32>} : memref<8x128xf32, #tpu.memory_space<vmem>>, vector<8x128xf32>,
    return
  }
  func.func @transform_0(%arg0: i32, %arg1: i32) -> (i32, i32) {
    %c1_i32 = arith.constant 1 : i32
    %0 = arith.muli %arg0, %c1_i32 : i32
    %1 = arith.addi %0, %arg1 : i32
    %c0_i32 = arith.constant 0 : i32
    %c0_i32_0 = arith.constant 0 : i32
    return %1, %c0_i32 : i32, i32
  }
  func.func @transform_1(%arg0: i32, %arg1: i32) -> (i32, i32) {
    %c0_i32 = arith.constant 0 : i32
    %c0_i32_0 = arith.constant 0 : i32
    return %arg0, %c0_i32 : i32, i32
  }
  func.func @transform_2(%arg0: i32, %arg1: i32) -> (i32, i32) {
    %c0_i32 = arith.constant 0 : i32
    %c0_i32_0 = arith.constant 0 : i32
    return %arg0, %c0_i32 : i32, i32
  }
  func.func @transform_3(%arg0: i32, %arg1: i32) -> (i32, i32) {
    %c0_i32 = arith.constant 0 : i32
    %c0_i32_0 = arith.constant 0 : i32
    %c0_i32_1 = arith.constant 0 : i32
    return %c0_i32, %c0_i32_0 : i32, i32
  }
  func.func @transform_4(%arg0: i32, %arg1: i32) -> (i32, i32) {
    %c0_i32 = arith.constant 0 : i32
    %c0_i32_0 = arith.constant 0 : i32
    %c0_i32_1 = arith.constant 0 : i32
    return %c0_i32, %c0_i32_0 : i32, i32
  }
  func.func @transform_5(%arg0: i32, %arg1: i32) -> (i32, i32) {
    %c0_i32 = arith.constant 0 : i32
    %c0_i32_0 = arith.constant 0 : i32
    %c0_i32_1 = arith.constant 0 : i32
    return %c0_i32, %c0_i32_0 : i32, i32
  }
  func.func @transform_6(%arg0: i32, %arg1: i32) -> (i32, i32) {
    %c0_i32 = arith.constant 0 : i32
    %c0_i32_0 = arith.constant 0 : i32
    %c0_i32_1 = arith.constant 0 : i32
    return %c0_i32, %c0_i32_0 : i32, i32
  }
  func.func @transform_7(%arg0: i32, %arg1: i32) -> (i32, i32) {
    %c0_i32 = arith.constant 0 : i32
    %c0_i32_0 = arith.constant 0 : i32
    %c0_i32_1 = arith.constant 0 : i32
    return %c0_i32, %c0_i32_0 : i32, i32
  }
  func.func @transform_8(%arg0: i32, %arg1: i32) -> (i32, i32) {
    %c0_i32 = arith.constant 0 : i32
    %c0_i32_0 = arith.constant 0 : i32
    %c0_i32_1 = arith.constant 0 : i32
    return %c0_i32, %c0_i32_0 : i32, i32
  }
  func.func @transform_9(%arg0: i32, %arg1: i32) -> (i32, i32) {
    %c0_i32 = arith.constant 0 : i32
    %c0_i32_0 = arith.constant 0 : i32
    %c0_i32_1 = arith.constant 0 : i32
    return %c0_i32, %c0_i32_0 : i32, i32
  }
  func.func @transform_10(%arg0: i32, %arg1: i32) -> (i32, i32) {
    %c0_i32 = arith.constant 0 : i32
    %c0_i32_0 = arith.constant 0 : i32
    %c0_i32_1 = arith.constant 0 : i32
    return %c0_i32, %c0_i32_0 : i32, i32
  }
  func.func @transform_11(%arg0: i32, %arg1: i32) -> (i32, i32) {
    %c0_i32 = arith.constant 0 : i32
    %c0_i32_0 = arith.constant 0 : i32
    %c0_i32_1 = arith.constant 0 : i32
    return %c0_i32, %c0_i32_0 : i32, i32
  }
  func.func @transform_12(%arg0: i32, %arg1: i32) -> (i32, i32) {
    %c0_i32 = arith.constant 0 : i32
    %c0_i32_0 = arith.constant 0 : i32
    %c0_i32_1 = arith.constant 0 : i32
    return %c0_i32, %c0_i32_0 : i32, i32
  }
  func.func @transform_13(%arg0: i32, %arg1: i32) -> (i32, i32) {
    %c1_i32 = arith.constant 1 : i32
    %0 = arith.muli %arg0, %c1_i32 : i32
    %1 = arith.addi %0, %arg1 : i32
    %c0_i32 = arith.constant 0 : i32
    %c0_i32_0 = arith.constant 0 : i32
    return %1, %c0_i32 : i32, i32
  }
}

</mosaic_0001>

<llo_original>
// kernel: tpu_custom_call.1
$region0: #{tpu_custom_call.1}
  #allocation0 [shape = 'u32[]', space=smem, size = 0x4, offset = 0x4, fixed_abs, tag = 'smem constant byte address 0x4 - core index']
  #allocation1 [shape = 'u32[144,128]{1,0:T(1,128)}', space=vmem, size = 0x12000, scoped, tag = 'internal scratch']
  %s0 = inlined_call_operand.vmem [shape: f32[16,128], index: 0, kind: input, shape index: {}]
  %s1 = inlined_call_operand.vmem [shape: f32[16,128], index: 1, kind: input, shape index: {}]
  %s2 = inlined_call_operand.vmem [shape: f32[16,128], index: 2, kind: input, shape index: {}]
  %s3 = inlined_call_operand.vmem [shape: f32[128,32], index: 3, kind: input, shape index: {}]
  %s4 = inlined_call_operand.vmem [shape: f32[1,32], index: 4, kind: input, shape index: {}]
  %s5 = inlined_call_operand.vmem [shape: f32[128,32], index: 5, kind: input, shape index: {}]
  %s6 = inlined_call_operand.vmem [shape: f32[1,32], index: 6, kind: input, shape index: {}]
  %s7 = inlined_call_operand.vmem [shape: f32[128,32], index: 7, kind: input, shape index: {}]
  %s8 = inlined_call_operand.vmem [shape: f32[1,32], index: 8, kind: input, shape index: {}]
  %s9 = inlined_call_operand.vmem [shape: f32[32,128], index: 9, kind: input, shape index: {}]
  %s10 = inlined_call_operand.vmem [shape: f32[1,128], index: 10, kind: input, shape index: {}]
  %s11 = inlined_call_operand.vmem [shape: f32[1,128], index: 11, kind: input, shape index: {}]
  %s12 = inlined_call_operand.vmem [shape: f32[1,128], index: 12, kind: input, shape index: {}]
  %s13 = inlined_call_operand.hbm [shape: f32[16,128], index: 13, kind: output, shape index: {}]
  %s14 = sld [smem:[#allocation0]]
  $region85: #{tpu_custom_call.1} parent=0
    _
  %s16 = ssub.s32 1, %s14
  %s17 = scalar_select 0, %s16, %s14
  $region1: #{tpu_custom_call.1} parent=0
    #allocation2 [shape = 'u8[8192]{0}', space=vmem, size = 0x2000, scoped, tag = 'output window, operand 0']
    #allocation3 [shape = 's32[2]{0}', space=sflag, size = 0x8, scoped, tag = 'scoped memory for tpu_custom_call.1']
    %18 = vsyncpa [#allocation3], 0
    %s19 = scalar_lea.sflag [#allocation3], 1
    %20 = vsyncpa %s19, 0
    loop: start=0, step=1, limit=4
    $region2: #{tpu_custom_call.1} parent=1 // loop_pre_header
      _
    $region3: #{tpu_custom_call.1} parent=1 // loop_header
      %s22 = sphi 0, %s26
      %p23 = scmp.ge.s32.totalorder %s22, 4
      %s29 = sphi 0, %s41
      %s30 = sphi 0, %s37
      %s31 = sphi 0, %s29
      %s32 = sphi 0, %s30
      %s33 = sphi 0, %s31
      %s34 = sphi 0, %s32
      %s46 = sphi 0, %s48
      %s49 = sphi 0, %s46
      %s50 = sphi 0, %s49
      %s66 = sphi 0, %s50
      %s72 = sphi 0, %s74
      %s75 = sphi 0, %s72
      %s76 = sphi 0, %s75
      %s92 = sphi 0, %s76
      %s98 = sphi 0, %s100
      %s101 = sphi 0, %s98
      %s102 = sphi 0, %s101
      %s118 = sphi 0, %s102
      %s122 = sphi 0, %s122
      %s124 = sphi 0, %s122
      %s125 = sphi 0, %s124
      %s139 = sphi 0, %s125
      %s143 = sphi 0, %s143
      %s145 = sphi 0, %s143
      %s146 = sphi 0, %s145
      %s160 = sphi 0, %s146
      %s164 = sphi 0, %s164
      %s166 = sphi 0, %s164
      %s167 = sphi 0, %s166
      %s181 = sphi 0, %s167
      %s185 = sphi 0, %s185
      %s187 = sphi 0, %s185
      %s188 = sphi 0, %s187
      %s202 = sphi 0, %s188
      %s206 = sphi 0, %s206
      %s208 = sphi 0, %s206
      %s209 = sphi 0, %s208
      %s223 = sphi 0, %s209
      %s227 = sphi 0, %s227
      %s229 = sphi 0, %s227
      %s230 = sphi 0, %s229
      %s244 = sphi 0, %s230
      %s248 = sphi 0, %s248
      %s250 = sphi 0, %s248
      %s251 = sphi 0, %s250
      %s265 = sphi 0, %s251
      %s269 = sphi 0, %s269
      %s271 = sphi 0, %s269
      %s272 = sphi 0, %s271
      %s286 = sphi 0, %s272
      %s290 = sphi 0, %s290
      %s292 = sphi 0, %s290
      %s293 = sphi 0, %s292
      %s307 = sphi 0, %s293
      %s311 = sphi 0, %s311
      %s313 = sphi 0, %s311
      %s314 = sphi 0, %s313
      %s328 = sphi 0, %s314
      %s336 = sphi 0, %s338
      %s339 = sphi 0, %s336
      %s340 = sphi 0, %s339
      %s356 = sphi 0, %s340
    $region4: #{tpu_custom_call.1} parent=1 // loop_header_branch
      %25 = sbr.rel (%p23) target = $region8
    $region5: #{tpu_custom_call.1} parent=1 // loop_body
      %s27 = ssub.s32 %s22, 1
      %s28 = ssub.s32 %s22, 2
      %s35 = sadd.s32 1, %s30
      %p36 = scmp.ge.s32.totalorder %s35, 1
      %s37 = scalar_select %p36, 0, %s35
      %s38 = sadd.s32 1, %s29
      %s39 = scalar_select %p36, %s38, %s29
      %p40 = scmp.ge.s32.totalorder %s39, 2
      %s41 = scalar_select %p40, 0, %s39
      %s42 = sadd.s32 %s29, %s30
      %s43 = sadd.s32 %s41, %s37
      %s44 = ssub.s32 %s42, %s43
      %p45 = scmp.eq.s32.totalorder %s44, 0
      %s47 = sadd.s32 %s46, 1
      %s48 = scalar_select %p45, %s46, %s47
      %p51 = pneg %p45
      %p52 = scmp.eq.s32.totalorder %s22, 1
      %p53 = por %p51, %p52
      %p54 = scmp.ne.s32.totalorder %s46, %s49
      %p55 = scmp.eq.s32.totalorder %s22, 0
      %p56 = por %p54, %p55
      %p57 = scmp.ne.s32.totalorder %s46, %s49
      %p58 = scmp.eq.s32.totalorder %s27, 1
      %p59 = por %p57, %p58
      %p60 = scmp.ne.s32.totalorder %s49, %s50
      %p61 = scmp.eq.s32.totalorder %s27, 0
      %p62 = por %p60, %p61
      %p63 = scmp.ne.s32.totalorder %s49, %s50
      %p64 = scmp.eq.s32.totalorder %s28, 1
      %p65 = por %p63, %p64
      %p67 = scmp.ne.s32.totalorder %s50, %s66
      %p68 = scmp.eq.s32.totalorder %s28, 0
      %p69 = por %p67, %p68
      %s70 = ssub.s32 %s29, %s41
      %p71 = scmp.eq.s32.totalorder %s70, 0
      %s73 = sadd.s32 %s72, 1
      %s74 = scalar_select %p71, %s72, %s73
      %p77 = pneg %p71
      %p78 = scmp.eq.s32.totalorder %s22, 1
      %p79 = por %p77, %p78
      %p80 = scmp.ne.s32.totalorder %s72, %s75
      %p81 = scmp.eq.s32.totalorder %s22, 0
      %p82 = por %p80, %p81
      %p83 = scmp.ne.s32.totalorder %s72, %s75
      %p84 = scmp.eq.s32.totalorder %s27, 1
      %p85 = por %p83, %p84
      %p86 = scmp.ne.s32.totalorder %s75, %s76
      %p87 = scmp.eq.s32.totalorder %s27, 0
      %p88 = por %p86, %p87
      %p89 = scmp.ne.s32.totalorder %s75, %s76
      %p90 = scmp.eq.s32.totalorder %s28, 1
      %p91 = por %p89, %p90
      %p93 = scmp.ne.s32.totalorder %s76, %s92
      %p94 = scmp.eq.s32.totalorder %s28, 0
      %p95 = por %p93, %p94
      %s96 = ssub.s32 %s29, %s41
      %p97 = scmp.eq.s32.totalorder %s96, 0
      %s99 = sadd.s32 %s98, 1
      %s100 = scalar_select %p97, %s98, %s99
      %p103 = pneg %p97
      %p104 = scmp.eq.s32.totalorder %s22, 1
      %p105 = por %p103, %p104
      %p106 = scmp.ne.s32.totalorder %s98, %s101
      %p107 = scmp.eq.s32.totalorder %s22, 0
      %p108 = por %p106, %p107
      %p109 = scmp.ne.s32.totalorder %s98, %s101
      %p110 = scmp.eq.s32.totalorder %s27, 1
      %p111 = por %p109, %p110
      %p112 = scmp.ne.s32.totalorder %s101, %s102
      %p113 = scmp.eq.s32.totalorder %s27, 0
      %p114 = por %p112, %p113
      %p115 = scmp.ne.s32.totalorder %s101, %s102
      %p116 = scmp.eq.s32.totalorder %s28, 1
      %p117 = por %p115, %p116
      %p119 = scmp.ne.s32.totalorder %s102, %s118
      %p120 = scmp.eq.s32.totalorder %s28, 0
      %p121 = por %p119, %p120
      %s123 = sadd.s32 %s122, 1
      %p126 = scmp.eq.s32.totalorder %s22, 1
      %p127 = scmp.ne.s32.totalorder %s122, %s124
      %p128 = scmp.eq.s32.totalorder %s22, 0
      %p129 = por %p127, %p128
      %p130 = scmp.ne.s32.totalorder %s122, %s124
      %p131 = scmp.eq.s32.totalorder %s27, 1
      %p132 = por %p130, %p131
      %p133 = scmp.ne.s32.totalorder %s124, %s125
      %p134 = scmp.eq.s32.totalorder %s27, 0
      %p135 = por %p133, %p134
      %p136 = scmp.ne.s32.totalorder %s124, %s125
      %p137 = scmp.eq.s32.totalorder %s28, 1
      %p138 = por %p136, %p137
      %p140 = scmp.ne.s32.totalorder %s125, %s139
      %p141 = scmp.eq.s32.totalorder %s28, 0
      %p142 = por %p140, %p141
      %s144 = sadd.s32 %s143, 1
      %p147 = scmp.eq.s32.totalorder %s22, 1
      %p148 = scmp.ne.s32.totalorder %s143, %s145
      %p149 = scmp.eq.s32.totalorder %s22, 0
      %p150 = por %p148, %p149
      %p151 = scmp.ne.s32.totalorder %s143, %s145
      %p152 = scmp.eq.s32.totalorder %s27, 1
      %p153 = por %p151, %p152
      %p154 = scmp.ne.s32.totalorder %s145, %s146
      %p155 = scmp.eq.s32.totalorder %s27, 0
      %p156 = por %p154, %p155
      %p157 = scmp.ne.s32.totalorder %s145, %s146
      %p158 = scmp.eq.s32.totalorder %s28, 1
      %p159 = por %p157, %p158
      %p161 = scmp.ne.s32.totalorder %s146, %s160
      %p162 = scmp.eq.s32.totalorder %s28, 0
      %p163 = por %p161, %p162
      %s165 = sadd.s32 %s164, 1
      %p168 = scmp.eq.s32.totalorder %s22, 1
      %p169 = scmp.ne.s32.totalorder %s164, %s166
      %p170 = scmp.eq.s32.totalorder %s22, 0
      %p171 = por %p169, %p170
      %p172 = scmp.ne.s32.totalorder %s164, %s166
      %p173 = scmp.eq.s32.totalorder %s27, 1
      %p174 = por %p172, %p173
      %p175 = scmp.ne.s32.totalorder %s166, %s167
      %p176 = scmp.eq.s32.totalorder %s27, 0
      %p177 = por %p175, %p176
      %p178 = scmp.ne.s32.totalorder %s166, %s167
      %p179 = scmp.eq.s32.totalorder %s28, 1
      %p180 = por %p178, %p179
      %p182 = scmp.ne.s32.totalorder %s167, %s181
      %p183 = scmp.eq.s32.totalorder %s28, 0
      %p184 = por %p182, %p183
      %s186 = sadd.s32 %s185, 1
      %p189 = scmp.eq.s32.totalorder %s22, 1
      %p190 = scmp.ne.s32.totalorder %s185, %s187
      %p191 = scmp.eq.s32.totalorder %s22, 0
      %p192 = por %p190, %p191
      %p193 = scmp.ne.s32.totalorder %s185, %s187
      %p194 = scmp.eq.s32.totalorder %s27, 1
      %p195 = por %p193, %p194
      %p196 = scmp.ne.s32.totalorder %s187, %s188
      %p197 = scmp.eq.s32.totalorder %s27, 0
      %p198 = por %p196, %p197
      %p199 = scmp.ne.s32.totalorder %s187, %s188
      %p200 = scmp.eq.s32.totalorder %s28, 1
      %p201 = por %p199, %p200
      %p203 = scmp.ne.s32.totalorder %s188, %s202
      %p204 = scmp.eq.s32.totalorder %s28, 0
      %p205 = por %p203, %p204
      %s207 = sadd.s32 %s206, 1
      %p210 = scmp.eq.s32.totalorder %s22, 1
      %p211 = scmp.ne.s32.totalorder %s206, %s208
      %p212 = scmp.eq.s32.totalorder %s22, 0
      %p213 = por %p211, %p212
      %p214 = scmp.ne.s32.totalorder %s206, %s208
      %p215 = scmp.eq.s32.totalorder %s27, 1
      %p216 = por %p214, %p215
      %p217 = scmp.ne.s32.totalorder %s208, %s209
      %p218 = scmp.eq.s32.totalorder %s27, 0
      %p219 = por %p217, %p218
      %p220 = scmp.ne.s32.totalorder %s208, %s209
      %p221 = scmp.eq.s32.totalorder %s28, 1
      %p222 = por %p220, %p221
      %p224 = scmp.ne.s32.totalorder %s209, %s223
      %p225 = scmp.eq.s32.totalorder %s28, 0
      %p226 = por %p224, %p225
      %s228 = sadd.s32 %s227, 1
      %p231 = scmp.eq.s32.totalorder %s22, 1
      %p232 = scmp.ne.s32.totalorder %s227, %s229
      %p233 = scmp.eq.s32.totalorder %s22, 0
      %p234 = por %p232, %p233
      %p235 = scmp.ne.s32.totalorder %s227, %s229
      %p236 = scmp.eq.s32.totalorder %s27, 1
      %p237 = por %p235, %p236
      %p238 = scmp.ne.s32.totalorder %s229, %s230
      %p239 = scmp.eq.s32.totalorder %s27, 0
      %p240 = por %p238, %p239
      %p241 = scmp.ne.s32.totalorder %s229, %s230
      %p242 = scmp.eq.s32.totalorder %s28, 1
      %p243 = por %p241, %p242
      %p245 = scmp.ne.s32.totalorder %s230, %s244
      %p246 = scmp.eq.s32.totalorder %s28, 0
      %p247 = por %p245, %p246
      %s249 = sadd.s32 %s248, 1
      %p252 = scmp.eq.s32.totalorder %s22, 1
      %p253 = scmp.ne.s32.totalorder %s248, %s250
      %p254 = scmp.eq.s32.totalorder %s22, 0
      %p255 = por %p253, %p254
      %p256 = scmp.ne.s32.totalorder %s248, %s250
      %p257 = scmp.eq.s32.totalorder %s27, 1
      %p258 = por %p256, %p257
      %p259 = scmp.ne.s32.totalorder %s250, %s251
      %p260 = scmp.eq.s32.totalorder %s27, 0
      %p261 = por %p259, %p260
      %p262 = scmp.ne.s32.totalorder %s250, %s251
      %p263 = scmp.eq.s32.totalorder %s28, 1
      %p264 = por %p262, %p263
      %p266 = scmp.ne.s32.totalorder %s251, %s265
      %p267 = scmp.eq.s32.totalorder %s28, 0
      %p268 = por %p266, %p267
      %s270 = sadd.s32 %s269, 1
      %p273 = scmp.eq.s32.totalorder %s22, 1
      %p274 = scmp.ne.s32.totalorder %s269, %s271
      %p275 = scmp.eq.s32.totalorder %s22, 0
      %p276 = por %p274, %p275
      %p277 = scmp.ne.s32.totalorder %s269, %s271
      %p278 = scmp.eq.s32.totalorder %s27, 1
      %p279 = por %p277, %p278
      %p280 = scmp.ne.s32.totalorder %s271, %s272
      %p281 = scmp.eq.s32.totalorder %s27, 0
      %p282 = por %p280, %p281
      %p283 = scmp.ne.s32.totalorder %s271, %s272
      %p284 = scmp.eq.s32.totalorder %s28, 1
      %p285 = por %p283, %p284
      %p287 = scmp.ne.s32.totalorder %s272, %s286
      %p288 = scmp.eq.s32.totalorder %s28, 0
      %p289 = por %p287, %p288
      %s291 = sadd.s32 %s290, 1
      %p294 = scmp.eq.s32.totalorder %s22, 1
      %p295 = scmp.ne.s32.totalorder %s290, %s292
      %p296 = scmp.eq.s32.totalorder %s22, 0
      %p297 = por %p295, %p296
      %p298 = scmp.ne.s32.totalorder %s290, %s292
      %p299 = scmp.eq.s32.totalorder %s27, 1
      %p300 = por %p298, %p299
      %p301 = scmp.ne.s32.totalorder %s292, %s293
      %p302 = scmp.eq.s32.totalorder %s27, 0
      %p303 = por %p301, %p302
      %p304 = scmp.ne.s32.totalorder %s292, %s293
      %p305 = scmp.eq.s32.totalorder %s28, 1
      %p306 = por %p304, %p305
      %p308 = scmp.ne.s32.totalorder %s293, %s307
      %p309 = scmp.eq.s32.totalorder %s28, 0
      %p310 = por %p308, %p309
      %s312 = sadd.s32 %s311, 1
      %p315 = scmp.eq.s32.totalorder %s22, 1
      %p316 = scmp.ne.s32.totalorder %s311, %s313
      %p317 = scmp.eq.s32.totalorder %s22, 0
      %p318 = por %p316, %p317
      %p319 = scmp.ne.s32.totalorder %s311, %s313
      %p320 = scmp.eq.s32.totalorder %s27, 1
      %p321 = por %p319, %p320
      %p322 = scmp.ne.s32.totalorder %s313, %s314
      %p323 = scmp.eq.s32.totalorder %s27, 0
      %p324 = por %p322, %p323
      %p325 = scmp.ne.s32.totalorder %s313, %s314
      %p326 = scmp.eq.s32.totalorder %s28, 1
      %p327 = por %p325, %p326
      %p329 = scmp.ne.s32.totalorder %s314, %s328
      %p330 = scmp.eq.s32.totalorder %s28, 0
      %p331 = por %p329, %p330
      %s332 = sadd.s32 %s29, %s30
      %s333 = sadd.s32 %s41, %s37
      %s334 = ssub.s32 %s332, %s333
      %p335 = scmp.eq.s32.totalorder %s334, 0
      %s337 = sadd.s32 %s336, 1
      %s338 = scalar_select %p335, %s336, %s337
      %p341 = pneg %p335
      %p342 = scmp.eq.s32.totalorder %s22, 1
      %p343 = por %p341, %p342
      %p344 = scmp.ne.s32.totalorder %s336, %s339
      %p345 = scmp.eq.s32.totalorder %s22, 0
      %p346 = por %p344, %p345
      %p347 = scmp.ne.s32.totalorder %s336, %s339
      %p348 = scmp.eq.s32.totalorder %s27, 1
      %p349 = por %p347, %p348
      %p350 = scmp.ne.s32.totalorder %s339, %s340
      %p351 = scmp.eq.s32.totalorder %s27, 0
      %p352 = por %p350, %p351
      %p353 = scmp.ne.s32.totalorder %s339, %s340
      %p354 = scmp.eq.s32.totalorder %s28, 1
      %p355 = por %p353, %p354
      %p357 = scmp.ne.s32.totalorder %s340, %s356
      %p358 = scmp.eq.s32.totalorder %s28, 0
      %p359 = por %p357, %p358
      %p360 = scmp.le.s32.totalorder 1, %s22
      %p361 = scmp.lt.s32.totalorder %s22, 3
      %p362 = pnand %p360, %p361
      %p363 = pneg %p362
      // Predicated region
      $region9: #{tpu_custom_call.1} parent=5 // pred_check
        _
      $region10: #{tpu_custom_call.1} parent=5 // pred_check_branch
        %365 = sbr.rel (%p362) target = $region12
      $region11: #{tpu_custom_call.1} parent=5 // pred_region
        %s366 = ssub.s32 %s22, 1
        // Predicated region
        $region13: #{tpu_custom_call.1} parent=11 // pred_check
          %p367 = pneg %p135
        $region14: #{tpu_custom_call.1} parent=11 // pred_check_branch
          %369 = sbr.rel (%p367) target = $region16
        $region15: #{tpu_custom_call.1} parent=11 // pred_region
          _
        $region16: #{tpu_custom_call.1} parent=11 // pred_fallthru
          _
        // Predicated region
        $region17: #{tpu_custom_call.1} parent=11 // pred_check
          %p370 = pneg %p156
        $region18: #{tpu_custom_call.1} parent=11 // pred_check_branch
          %372 = sbr.rel (%p370) target = $region20
        $region19: #{tpu_custom_call.1} parent=11 // pred_region
          _
        $region20: #{tpu_custom_call.1} parent=11 // pred_fallthru
          _
        // Predicated region
        $region21: #{tpu_custom_call.1} parent=11 // pred_check
          %p373 = pneg %p177
        $region22: #{tpu_custom_call.1} parent=11 // pred_check_branch
          %375 = sbr.rel (%p373) target = $region24
        $region23: #{tpu_custom_call.1} parent=11 // pred_region
          _
        $region24: #{tpu_custom_call.1} parent=11 // pred_fallthru
          _
        // Predicated region
        $region25: #{tpu_custom_call.1} parent=11 // pred_check
          %p376 = pneg %p198
        $region26: #{tpu_custom_call.1} parent=11 // pred_check_branch
          %378 = sbr.rel (%p376) target = $region28
        $region27: #{tpu_custom_call.1} parent=11 // pred_region
          _
        $region28: #{tpu_custom_call.1} parent=11 // pred_fallthru
          _
        // Predicated region
        $region29: #{tpu_custom_call.1} parent=11 // pred_check
          %p379 = pneg %p219
        $region30: #{tpu_custom_call.1} parent=11 // pred_check_branch
          %381 = sbr.rel (%p379) target = $region32
        $region31: #{tpu_custom_call.1} parent=11 // pred_region
          _
        $region32: #{tpu_custom_call.1} parent=11 // pred_fallthru
          _
        // Predicated region
        $region33: #{tpu_custom_call.1} parent=11 // pred_check
          %p382 = pneg %p240
        $region34: #{tpu_custom_call.1} parent=11 // pred_check_branch
          %384 = sbr.rel (%p382) target = $region36
        $region35: #{tpu_custom_call.1} parent=11 // pred_region
          _
        $region36: #{tpu_custom_call.1} parent=11 // pred_fallthru
          _
        // Predicated region
        $region37: #{tpu_custom_call.1} parent=11 // pred_check
          %p385 = pneg %p261
        $region38: #{tpu_custom_call.1} parent=11 // pred_check_branch
          %387 = sbr.rel (%p385) target = $region40
        $region39: #{tpu_custom_call.1} parent=11 // pred_region
          _
        $region40: #{tpu_custom_call.1} parent=11 // pred_fallthru
          _
        // Predicated region
        $region41: #{tpu_custom_call.1} parent=11 // pred_check
          %p388 = pneg %p282
        $region42: #{tpu_custom_call.1} parent=11 // pred_check_branch
          %390 = sbr.rel (%p388) target = $region44
        $region43: #{tpu_custom_call.1} parent=11 // pred_region
          _
        $region44: #{tpu_custom_call.1} parent=11 // pred_fallthru
          _
        // Predicated region
        $region45: #{tpu_custom_call.1} parent=11 // pred_check
          %p391 = pneg %p303
        $region46: #{tpu_custom_call.1} parent=11 // pred_check_branch
          %393 = sbr.rel (%p391) target = $region48
        $region47: #{tpu_custom_call.1} parent=11 // pred_region
          _
        $region48: #{tpu_custom_call.1} parent=11 // pred_fallthru
          _
        // Predicated region
        $region49: #{tpu_custom_call.1} parent=11 // pred_check
          %p394 = pneg %p324
        $region50: #{tpu_custom_call.1} parent=11 // pred_check_branch
          %396 = sbr.rel (%p394) target = $region52
        $region51: #{tpu_custom_call.1} parent=11 // pred_region
          _
        $region52: #{tpu_custom_call.1} parent=11 // pred_fallthru
          _
      $region12: #{tpu_custom_call.1} parent=5 // pred_fallthru
        _
      %p397 = scmp.lt.s32.totalorder %s22, 2
      // Predicated region
      $region53: #{tpu_custom_call.1} parent=5 // pred_check
        %p398 = pneg %p397
      $region54: #{tpu_custom_call.1} parent=5 // pred_check_branch
        %400 = sbr.rel (%p398) target = $region56
      $region55: #{tpu_custom_call.1} parent=5 // pred_region
        // Predicated region
        $region57: #{tpu_custom_call.1} parent=55 // pred_check
          %p401 = pneg %p56
        $region58: #{tpu_custom_call.1} parent=55 // pred_check_branch
          %403 = sbr.rel (%p401) target = $region60
        $region59: #{tpu_custom_call.1} parent=55 // pred_region
          %s404 = sadd.s32 %s29, %s30
          %p405 = scmp.lt.s32.totalorder %s404, 1
          %s406 = scalar_select %p405, %s404, 1
          %s407 = smul.addr %s406, 8
          %s408 = scalar_lea.vmem %s0, %s407
          %s409 = sadd.s32 %s29, %s30
        $region60: #{tpu_custom_call.1} parent=55 // pred_fallthru
          _
        // Predicated region
        $region61: #{tpu_custom_call.1} parent=55 // pred_check
          %p410 = pneg %p82
        $region62: #{tpu_custom_call.1} parent=55 // pred_check_branch
          %412 = sbr.rel (%p410) target = $region64
        $region63: #{tpu_custom_call.1} parent=55 // pred_region
          %p413 = scmp.lt.s32.totalorder %s29, 1
          %s414 = scalar_select %p413, %s29, 1
          %s415 = smul.addr %s414, 8
          %s416 = scalar_lea.vmem %s1, %s415
        $region64: #{tpu_custom_call.1} parent=55 // pred_fallthru
          _
        // Predicated region
        $region65: #{tpu_custom_call.1} parent=55 // pred_check
          %p417 = pneg %p108
        $region66: #{tpu_custom_call.1} parent=55 // pred_check_branch
          %419 = sbr.rel (%p417) target = $region68
        $region67: #{tpu_custom_call.1} parent=55 // pred_region
          %p420 = scmp.lt.s32.totalorder %s29, 1
          %s421 = scalar_select %p420, %s29, 1
          %s422 = smul.addr %s421, 8
          %s423 = scalar_lea.vmem %s2, %s422
        $region68: #{tpu_custom_call.1} parent=55 // pred_fallthru
          _
      $region56: #{tpu_custom_call.1} parent=5 // pred_fallthru
        _
      %p424 = scmp.le.s32.totalorder 1, %s22
      %p425 = scmp.lt.s32.totalorder %s22, 3
      %p426 = pnand %p424, %p425
      %p427 = pneg %p426
      // Predicated region
      $region69: #{tpu_custom_call.1} parent=5 // pred_check
        _
      $region70: #{tpu_custom_call.1} parent=5 // pred_check_branch
        %429 = sbr.rel (%p426) target = $region72
      $region71: #{tpu_custom_call.1} parent=5 // pred_region
        %s430 = ssub.s32 %s22, 1
        %s431 = sadd.s32 %s31, %s32
        %p432 = scmp.lt.s32.totalorder %s431, 1
        %s433 = scalar_select %p432, %s431, 1
        %s434 = smul.addr %s433, 8
        %s435 = scalar_lea.vmem %s0, %s434
        %p436 = pneg %p62
        %p437 = pneg %p59
        %p438 = scmp.lt.s32.totalorder %s31, 1
        %s439 = scalar_select %p438, %s31, 1
        %s440 = smul.addr %s439, 8
        %s441 = scalar_lea.vmem %s1, %s440
        %p442 = pneg %p88
        %p443 = pneg %p85
        %p444 = scmp.lt.s32.totalorder %s31, 1
        %s445 = scalar_select %p444, %s31, 1
        %s446 = smul.addr %s445, 8
        %s447 = scalar_lea.vmem %s2, %s446
        %p448 = pneg %p114
        %p449 = pneg %p111
        %p450 = pneg %p135
        %p451 = pneg %p132
        %p452 = pneg %p156
        %p453 = pneg %p153
        %p454 = pneg %p177
        %p455 = pneg %p174
        %p456 = pneg %p198
        %p457 = pneg %p195
        %p458 = pneg %p219
        %p459 = pneg %p216
        %p460 = pneg %p240
        %p461 = pneg %p237
        %p462 = pneg %p261
        %p463 = pneg %p258
        %p464 = pneg %p282
        %p465 = pneg %p279
        %p466 = pneg %p303
        %p467 = pneg %p300
        %p468 = pneg %p324
        %p469 = pneg %p321
        %p470 = pneg %p352
        %p471 = pneg %p349
        %s472 = sand.u32 %s339, 1
        %s473 = scalar_lea.sflag [#allocation3], %s472
        %s474 = sand.u32 %s339, 1
        %s475 = smul.addr %s474, 8
        %s476 = scalar_lea.vmem [#allocation2], %s475
        %s477 = sadd.s32 %s31, %s32
        %p478 = scmp.lt.s32.totalorder %s477, 1
        %s479 = scalar_select %p478, %s477, 1
        %s480 = smul.addr %s479, 8
        %s481 = scalar_lea.vmem %s0, %s480
        %s482 = sadd.s32 %s31, %s32
        %p483 = scmp.lt.s32.totalorder %s31, 1
        %s484 = scalar_select %p483, %s31, 1
        %s485 = smul.addr %s484, 8
        %s486 = scalar_lea.vmem %s1, %s485
        %p487 = scmp.lt.s32.totalorder %s31, 1
        %s488 = scalar_select %p487, %s31, 1
        %s489 = smul.addr %s488, 8
        %s490 = scalar_lea.vmem %s2, %s489
        %s491 = sadd.s32 %s31, %s32
        %v492 = vld [vmem:[%s481] sm:$0xff]
        %v493 = vld [vmem:[%s486] sm:$0xff]
        %v494 = vld [vmem:[%s490] sm:$0xff]
        %v495 = vld [vmem:[%s3] sm:$0xff]
        %v496 = vld [vmem:[%s3 + $0x8] sm:$0xff]
        %v497 = vld [vmem:[%s3 + $0x10] sm:$0xff]
        %v498 = vld [vmem:[%s3 + $0x18] sm:$0xff]
        %v499 = vld [vmem:[%s3 + $0x20] sm:$0xff]
        %v500 = vld [vmem:[%s3 + $0x28] sm:$0xff]
        %v501 = vld [vmem:[%s3 + $0x30] sm:$0xff]
        %v502 = vld [vmem:[%s3 + $0x38] sm:$0xff]
        %v503 = vld [vmem:[%s3 + $0x40] sm:$0xff]
        %v504 = vld [vmem:[%s3 + $0x48] sm:$0xff]
        %v505 = vld [vmem:[%s3 + $0x50] sm:$0xff]
        %v506 = vld [vmem:[%s3 + $0x58] sm:$0xff]
        %v507 = vld [vmem:[%s3 + $0x60] sm:$0xff]
        %v508 = vld [vmem:[%s3 + $0x68] sm:$0xff]
        %v509 = vld [vmem:[%s3 + $0x70] sm:$0xff]
        %v510 = vld [vmem:[%s3 + $0x78] sm:$0xff]
        %v511 = vld [vmem:[%s4] sm:$0x1]
        %v513 = vlaneseq
        %v514 = vshrl.u32 %v513, 7
        %v515 = vsub.s32 0, %v514
        %v516 = vrot.slane %v511, %v515
        %518 = vmatprep.subr.mxu0 0.0
        %519 = vmatpush1.msra.mxu0 %v495
        %520 = vmatprep.subr.mxu0 0.0
        %521 = vmatpush1.msra.mxu0 %v496
        %522 = vmatprep.subr.mxu0 0.0
        %523 = vmatpush1.msra.mxu0 %v497
        %524 = vmatprep.subr.mxu0 0.0
        %525 = vmatpush1.msra.mxu0 %v498
        %526 = vmatprep.subr.mxu0 0.0
        %527 = vmatpush1.msra.mxu0 %v499
        %528 = vmatprep.subr.mxu0 0.0
        %529 = vmatpush1.msra.mxu0 %v500
        %530 = vmatprep.subr.mxu0 0.0
        %531 = vmatpush1.msra.mxu0 %v501
        %532 = vmatprep.subr.mxu0 0.0
        %533 = vmatpush1.msra.mxu0 %v502
        %534 = vmatprep.subr.mxu0 0.0
        %535 = vmatpush1.msra.mxu0 %v503
        %536 = vmatprep.subr.mxu0 0.0
        %537 = vmatpush1.msra.mxu0 %v504
        %538 = vmatprep.subr.mxu0 0.0
        %539 = vmatpush1.msra.mxu0 %v505
        %540 = vmatprep.subr.mxu0 0.0
        %541 = vmatpush1.msra.mxu0 %v506
        %542 = vmatprep.subr.mxu0 0.0
        %543 = vmatpush1.msra.mxu0 %v507
        %544 = vmatprep.subr.mxu0 0.0
        %545 = vmatpush1.msra.mxu0 %v508
        %546 = vmatprep.subr.mxu0 0.0
        %547 = vmatpush1.msra.mxu0 %v509
        %548 = vmatprep.subr.mxu0 0.0
        %549 = vmatpush1.msra.mxu0 %v510
        %550 = vmatprep.subr.mxu0 0.0
        %551 = vmatpush1.msra.mxu0 0.0
        %552 = vmatprep.subr.mxu0 0.0
        %553 = vmatpush1.msra.mxu0 0.0
        %554 = vmatprep.subr.mxu0 0.0
        %555 = vmatpush1.msra.mxu0 0.0
        %556 = vmatprep.subr.mxu0 0.0
        %557 = vmatpush1.msra.mxu0 0.0
        %558 = vmatprep.subr.mxu0 0.0
        %559 = vmatpush1.msra.mxu0 0.0
        %560 = vmatprep.subr.mxu0 0.0
        %561 = vmatpush1.msra.mxu0 0.0
        %562 = vmatprep.subr.mxu0 0.0
        %563 = vmatpush1.msra.mxu0 0.0
        %564 = vmatprep.subr.mxu0 0.0
        %565 = vmatpush1.msra.mxu0 0.0
        %566 = vmatprep.subr.mxu0 0.0
        %567 = vmatpush1.msra.mxu0 0.0
        %568 = vmatprep.subr.mxu0 0.0
        %569 = vmatpush1.msra.mxu0 0.0
        %570 = vmatprep.subr.mxu0 0.0
        %571 = vmatpush1.msra.mxu0 0.0
        %572 = vmatprep.subr.mxu0 0.0
        %573 = vmatpush1.msra.mxu0 0.0
        %574 = vmatprep.subr.mxu0 0.0
        %575 = vmatpush1.msra.mxu0 0.0
        %576 = vmatprep.subr.mxu0 0.0
        %577 = vmatpush1.msra.mxu0 0.0
        %578 = vmatprep.subr.mxu0 0.0
        %579 = vmatpush1.msra.mxu0 0.0
        %580 = vmatprep.subr.mxu0 0.0
        %581 = vmatpush1.msra.mxu0 0.0
        %582 = vmatprep.mubr.f32.mxu0 0.0
        %583 = vmatmul.mubr.f32.gmra.mrb[0].mxu0 %v492
        %v584 = vpop.f32.mrb[0].mxu0
        %v585 = vadd.f32 %v516, %v584
        %v586 = vpop.f32.mrb[0].mxu0
        %587 = vdwg.mxu0
        %v588 = vld [vmem:[%s5] sm:$0xff]
        %v589 = vld [vmem:[%s5 + $0x8] sm:$0xff]
        %v590 = vld [vmem:[%s5 + $0x10] sm:$0xff]
        %v591 = vld [vmem:[%s5 + $0x18] sm:$0xff]
        %v592 = vld [vmem:[%s5 + $0x20] sm:$0xff]
        %v593 = vld [vmem:[%s5 + $0x28] sm:$0xff]
        %v594 = vld [vmem:[%s5 + $0x30] sm:$0xff]
        %v595 = vld [vmem:[%s5 + $0x38] sm:$0xff]
        %v596 = vld [vmem:[%s5 + $0x40] sm:$0xff]
        %v597 = vld [vmem:[%s5 + $0x48] sm:$0xff]
        %v598 = vld [vmem:[%s5 + $0x50] sm:$0xff]
        %v599 = vld [vmem:[%s5 + $0x58] sm:$0xff]
        %v600 = vld [vmem:[%s5 + $0x60] sm:$0xff]
        %v601 = vld [vmem:[%s5 + $0x68] sm:$0xff]
        %v602 = vld [vmem:[%s5 + $0x70] sm:$0xff]
        %v603 = vld [vmem:[%s5 + $0x78] sm:$0xff]
        %v604 = vld [vmem:[%s6] sm:$0x1]
        %v606 = vlaneseq
        %v607 = vshrl.u32 %v606, 7
        %v608 = vsub.s32 0, %v607
        %v609 = vrot.slane %v604, %v608
        %611 = vmatprep.subr.mxu0 0.0
        %612 = vmatpush1.msra.mxu0 %v588
        %613 = vmatprep.subr.mxu0 0.0
        %614 = vmatpush1.msra.mxu0 %v589
        %615 = vmatprep.subr.mxu0 0.0
        %616 = vmatpush1.msra.mxu0 %v590
        %617 = vmatprep.subr.mxu0 0.0
        %618 = vmatpush1.msra.mxu0 %v591
        %619 = vmatprep.subr.mxu0 0.0
        %620 = vmatpush1.msra.mxu0 %v592
        %621 = vmatprep.subr.mxu0 0.0
        %622 = vmatpush1.msra.mxu0 %v593
        %623 = vmatprep.subr.mxu0 0.0
        %624 = vmatpush1.msra.mxu0 %v594
        %625 = vmatprep.subr.mxu0 0.0
        %626 = vmatpush1.msra.mxu0 %v595
        %627 = vmatprep.subr.mxu0 0.0
        %628 = vmatpush1.msra.mxu0 %v596
        %629 = vmatprep.subr.mxu0 0.0
        %630 = vmatpush1.msra.mxu0 %v597
        %631 = vmatprep.subr.mxu0 0.0
        %632 = vmatpush1.msra.mxu0 %v598
        %633 = vmatprep.subr.mxu0 0.0
        %634 = vmatpush1.msra.mxu0 %v599
        %635 = vmatprep.subr.mxu0 0.0
        %636 = vmatpush1.msra.mxu0 %v600
        %637 = vmatprep.subr.mxu0 0.0
        %638 = vmatpush1.msra.mxu0 %v601
        %639 = vmatprep.subr.mxu0 0.0
        %640 = vmatpush1.msra.mxu0 %v602
        %641 = vmatprep.subr.mxu0 0.0
        %642 = vmatpush1.msra.mxu0 %v603
        %643 = vmatprep.subr.mxu0 0.0
        %644 = vmatpush1.msra.mxu0 0.0
        %645 = vmatprep.subr.mxu0 0.0
        %646 = vmatpush1.msra.mxu0 0.0
        %647 = vmatprep.subr.mxu0 0.0
        %648 = vmatpush1.msra.mxu0 0.0
        %649 = vmatprep.subr.mxu0 0.0
        %650 = vmatpush1.msra.mxu0 0.0
        %651 = vmatprep.subr.mxu0 0.0
        %652 = vmatpush1.msra.mxu0 0.0
        %653 = vmatprep.subr.mxu0 0.0
        %654 = vmatpush1.msra.mxu0 0.0
        %655 = vmatprep.subr.mxu0 0.0
        %656 = vmatpush1.msra.mxu0 0.0
        %657 = vmatprep.subr.mxu0 0.0
        %658 = vmatpush1.msra.mxu0 0.0
        %659 = vmatprep.subr.mxu0 0.0
        %660 = vmatpush1.msra.mxu0 0.0
        %661 = vmatprep.subr.mxu0 0.0
        %662 = vmatpush1.msra.mxu0 0.0
        %663 = vmatprep.subr.mxu0 0.0
        %664 = vmatpush1.msra.mxu0 0.0
        %665 = vmatprep.subr.mxu0 0.0
        %666 = vmatpush1.msra.mxu0 0.0
        %667 = vmatprep.subr.mxu0 0.0
        %668 = vmatpush1.msra.mxu0 0.0
        %669 = vmatprep.subr.mxu0 0.0
        %670 = vmatpush1.msra.mxu0 0.0
        %671 = vmatprep.subr.mxu0 0.0
        %672 = vmatpush1.msra.mxu0 0.0
        %673 = vmatprep.subr.mxu0 0.0
        %674 = vmatpush1.msra.mxu0 0.0
        %675 = vmatprep.mubr.f32.mxu0 0.0
        %676 = vmatmul.mubr.f32.gmra.mrb[0].mxu0 %v493
        %v677 = vpop.f32.mrb[0].mxu0
        %v678 = vadd.f32 %v609, %v677
        %v679 = vpop.f32.mrb[0].mxu0
        %680 = vdwg.mxu0
        %v681 = vld [vmem:[%s7] sm:$0xff]
        %v682 = vld [vmem:[%s7 + $0x8] sm:$0xff]
        %v683 = vld [vmem:[%s7 + $0x10] sm:$0xff]
        %v684 = vld [vmem:[%s7 + $0x18] sm:$0xff]
        %v685 = vld [vmem:[%s7 + $0x20] sm:$0xff]
        %v686 = vld [vmem:[%s7 + $0x28] sm:$0xff]
        %v687 = vld [vmem:[%s7 + $0x30] sm:$0xff]
        %v688 = vld [vmem:[%s7 + $0x38] sm:$0xff]
        %v689 = vld [vmem:[%s7 + $0x40] sm:$0xff]
        %v690 = vld [vmem:[%s7 + $0x48] sm:$0xff]
        %v691 = vld [vmem:[%s7 + $0x50] sm:$0xff]
        %v692 = vld [vmem:[%s7 + $0x58] sm:$0xff]
        %v693 = vld [vmem:[%s7 + $0x60] sm:$0xff]
        %v694 = vld [vmem:[%s7 + $0x68] sm:$0xff]
        %v695 = vld [vmem:[%s7 + $0x70] sm:$0xff]
        %v696 = vld [vmem:[%s7 + $0x78] sm:$0xff]
        %v697 = vld [vmem:[%s8] sm:$0x1]
        %v699 = vlaneseq
        %v700 = vshrl.u32 %v699, 7
        %v701 = vsub.s32 0, %v700
        %v702 = vrot.slane %v697, %v701
        %704 = vmatprep.subr.mxu0 0.0
        %705 = vmatpush1.msra.mxu0 %v681
        %706 = vmatprep.subr.mxu0 0.0
        %707 = vmatpush1.msra.mxu0 %v682
        %708 = vmatprep.subr.mxu0 0.0
        %709 = vmatpush1.msra.mxu0 %v683
        %710 = vmatprep.subr.mxu0 0.0
        %711 = vmatpush1.msra.mxu0 %v684
        %712 = vmatprep.subr.mxu0 0.0
        %713 = vmatpush1.msra.mxu0 %v685
        %714 = vmatprep.subr.mxu0 0.0
        %715 = vmatpush1.msra.mxu0 %v686
        %716 = vmatprep.subr.mxu0 0.0
        %717 = vmatpush1.msra.mxu0 %v687
        %718 = vmatprep.subr.mxu0 0.0
        %719 = vmatpush1.msra.mxu0 %v688
        %720 = vmatprep.subr.mxu0 0.0
        %721 = vmatpush1.msra.mxu0 %v689
        %722 = vmatprep.subr.mxu0 0.0
        %723 = vmatpush1.msra.mxu0 %v690
        %724 = vmatprep.subr.mxu0 0.0
        %725 = vmatpush1.msra.mxu0 %v691
        %726 = vmatprep.subr.mxu0 0.0
        %727 = vmatpush1.msra.mxu0 %v692
        %728 = vmatprep.subr.mxu0 0.0
        %729 = vmatpush1.msra.mxu0 %v693
        %730 = vmatprep.subr.mxu0 0.0
        %731 = vmatpush1.msra.mxu0 %v694
        %732 = vmatprep.subr.mxu0 0.0
        %733 = vmatpush1.msra.mxu0 %v695
        %734 = vmatprep.subr.mxu0 0.0
        %735 = vmatpush1.msra.mxu0 %v696
        %736 = vmatprep.subr.mxu0 0.0
        %737 = vmatpush1.msra.mxu0 0.0
        %738 = vmatprep.subr.mxu0 0.0
        %739 = vmatpush1.msra.mxu0 0.0
        %740 = vmatprep.subr.mxu0 0.0
        %741 = vmatpush1.msra.mxu0 0.0
        %742 = vmatprep.subr.mxu0 0.0
        %743 = vmatpush1.msra.mxu0 0.0
        %744 = vmatprep.subr.mxu0 0.0
        %745 = vmatpush1.msra.mxu0 0.0
        %746 = vmatprep.subr.mxu0 0.0
        %747 = vmatpush1.msra.mxu0 0.0
        %748 = vmatprep.subr.mxu0 0.0
        %749 = vmatpush1.msra.mxu0 0.0
        %750 = vmatprep.subr.mxu0 0.0
        %751 = vmatpush1.msra.mxu0 0.0
        %752 = vmatprep.subr.mxu0 0.0
        %753 = vmatpush1.msra.mxu0 0.0
        %754 = vmatprep.subr.mxu0 0.0
        %755 = vmatpush1.msra.mxu0 0.0
        %756 = vmatprep.subr.mxu0 0.0
        %757 = vmatpush1.msra.mxu0 0.0
        %758 = vmatprep.subr.mxu0 0.0
        %759 = vmatpush1.msra.mxu0 0.0
        %760 = vmatprep.subr.mxu0 0.0
        %761 = vmatpush1.msra.mxu0 0.0
        %762 = vmatprep.subr.mxu0 0.0
        %763 = vmatpush1.msra.mxu0 0.0
        %764 = vmatprep.subr.mxu0 0.0
        %765 = vmatpush1.msra.mxu0 0.0
        %766 = vmatprep.subr.mxu0 0.0
        %767 = vmatpush1.msra.mxu0 0.0
        %768 = vmatprep.mubr.f32.mxu0 0.0
        %769 = vmatmul.mubr.f32.gmra.mrb[0].mxu0 %v494
        %v770 = vpop.f32.mrb[0].mxu0
        %v771 = vadd.f32 %v702, %v770
        %v772 = vpop.f32.mrb[0].mxu0
        %773 = vdwg.mxu0
        %775 = vrot.lane.b32.xlu0 %v585, 120
        %v776 = vpop.permute.xlu0 %775
        %778 = vrot.lane.b32.xlu0 %v585, 112
        %v779 = vpop.permute.xlu0 %778
        %781 = vrot.lane.b32.xlu0 %v585, 104
        %v782 = vpop.permute.xlu0 %781
        %v784 = vcombine.low %v585, %v779
        %v785 = vcombine.high %v585, %v779
        %v787 = vunpack.c.l.s4 1983009808
        %v788 = vunpack.c.0.s8 %v787
        %v789 = vlaneseq
        %v790 = vshrl.u32 %v789, 7
        %v791 = vsub.s32 %v788, %v790
        %v792 = vrot.slane %v784, %v791
        %v794 = vunpack.c.l.s4 1983009808
        %v795 = vunpack.c.0.s8 %v794
        %v796 = vlaneseq
        %v797 = vshrl.u32 %v796, 7
        %v798 = vsub.s32 %v795, %v797
        %v799 = vrot.slane %v785, %v798
        %v800 = vcombine.low %v776, %v782
        %v801 = vcombine.high %v776, %v782
        %v803 = vunpack.c.l.s4 1983009808
        %v804 = vunpack.c.0.s8 %v803
        %v805 = vlaneseq
        %v806 = vshrl.u32 %v805, 7
        %v807 = vsub.s32 %v804, %v806
        %v808 = vrot.slane %v800, %v807
        %v810 = vunpack.c.l.s4 1983009808
        %v811 = vunpack.c.0.s8 %v810
        %v812 = vlaneseq
        %v813 = vshrl.u32 %v812, 7
        %v814 = vsub.s32 %v811, %v813
        %v815 = vrot.slane %v801, %v814
        %v816 = vcombine.low %v792, %v808
        %v817 = vcombine.high %v792, %v808
        %v819 = vunpack.c.l.s4 1934713408
        %v820 = vunpack.c.0.s8 %v819
        %v821 = vlaneseq
        %v822 = vshrl.u32 %v821, 7
        %v823 = vsub.s32 %v820, %v822
        %v824 = vrot.slane %v816, %v823
        %v826 = vunpack.c.l.s4 1934713408
        %v827 = vunpack.c.0.s8 %v826
        %v828 = vlaneseq
        %v829 = vshrl.u32 %v828, 7
        %v830 = vsub.s32 %v827, %v829
        %v831 = vrot.slane %v817, %v830
        %v832 = vcombine.low %v799, %v815
        %v833 = vcombine.high %v799, %v815
        %v835 = vunpack.c.l.s4 1934713408
        %v836 = vunpack.c.0.s8 %v835
        %v837 = vlaneseq
        %v838 = vshrl.u32 %v837, 7
        %v839 = vsub.s32 %v836, %v838
        %v840 = vrot.slane %v832, %v839
        %v842 = vunpack.c.l.s4 1934713408
        %v843 = vunpack.c.0.s8 %v842
        %v844 = vlaneseq
        %v845 = vshrl.u32 %v844, 7
        %v846 = vsub.s32 %v843, %v845
        %v847 = vrot.slane %v833, %v846
        %v848 = vcombine.high %v824, 0.0
        %v849 = vcombine.high %v831, 0.0
        %v850 = vcombine.high %v840, 0.0
        %v851 = vcombine.high %v847, 0.0
        %v852 = vcombine.low %v824, %v831
        %v854 = vunpack.c.l.s4 1983009808
        %v855 = vunpack.c.0.s8 %v854
        %v856 = vlaneseq
        %v857 = vshrl.u32 %v856, 7
        %v858 = vsub.s32 %v855, %v857
        %v859 = vrot.slane %v852, %v858
        %v860 = vcombine.low %v848, %v849
        %v862 = vunpack.c.l.s4 1983009808
        %v863 = vunpack.c.0.s8 %v862
        %v864 = vlaneseq
        %v865 = vshrl.u32 %v864, 7
        %v866 = vsub.s32 %v863, %v865
        %v867 = vrot.slane %v860, %v866
        %v868 = vcombine.low %v840, %v847
        %v870 = vunpack.c.l.s4 1983009808
        %v871 = vunpack.c.0.s8 %v870
        %v872 = vlaneseq
        %v873 = vshrl.u32 %v872, 7
        %v874 = vsub.s32 %v871, %v873
        %v875 = vrot.slane %v868, %v874
        %v876 = vcombine.low %v850, %v851
        %v878 = vunpack.c.l.s4 1983009808
        %v879 = vunpack.c.0.s8 %v878
        %v880 = vlaneseq
        %v881 = vshrl.u32 %v880, 7
        %v882 = vsub.s32 %v879, %v881
        %v883 = vrot.slane %v876, %v882
        %v884 = vcombine.low %v859, %v867
        %v885 = vcombine.high %v859, %v867
        %v887 = vunpack.c.l.s4 1934713408
        %v888 = vunpack.c.0.s8 %v887
        %v889 = vlaneseq
        %v890 = vshrl.u32 %v889, 7
        %v891 = vsub.s32 %v888, %v890
        %v892 = vrot.slane %v884, %v891
        %v894 = vunpack.c.l.s4 1934713408
        %v895 = vunpack.c.0.s8 %v894
        %v896 = vlaneseq
        %v897 = vshrl.u32 %v896, 7
        %v898 = vsub.s32 %v895, %v897
        %v899 = vrot.slane %v885, %v898
        %v900 = vcombine.low %v875, %v883
        %v901 = vcombine.high %v875, %v883
        %v903 = vunpack.c.l.s4 1934713408
        %v904 = vunpack.c.0.s8 %v903
        %v905 = vlaneseq
        %v906 = vshrl.u32 %v905, 7
        %v907 = vsub.s32 %v904, %v906
        %v908 = vrot.slane %v900, %v907
        %v910 = vunpack.c.l.s4 1934713408
        %v911 = vunpack.c.0.s8 %v910
        %v912 = vlaneseq
        %v913 = vshrl.u32 %v912, 7
        %v914 = vsub.s32 %v911, %v913
        %v915 = vrot.slane %v901, %v914
        %v916 = vcombine.low %v892, %v908
        %v917 = vcombine.high %v892, %v908
        %v918 = vcombine.low %v899, %v915
        %v919 = vcombine.high %v899, %v915
        %921 = vrot.lane.b32.xlu0 %v678, 120
        %v922 = vpop.permute.xlu0 %921
        %924 = vrot.lane.b32.xlu0 %v678, 112
        %v925 = vpop.permute.xlu0 %924
        %927 = vrot.lane.b32.xlu0 %v678, 104
        %v928 = vpop.permute.xlu0 %927
        %v930 = vcombine.low %v678, %v925
        %v931 = vcombine.high %v678, %v925
        %v933 = vunpack.c.l.s4 1983009808
        %v934 = vunpack.c.0.s8 %v933
        %v935 = vlaneseq
        %v936 = vshrl.u32 %v935, 7
        %v937 = vsub.s32 %v934, %v936
        %v938 = vrot.slane %v930, %v937
        %v940 = vunpack.c.l.s4 1983009808
        %v941 = vunpack.c.0.s8 %v940
        %v942 = vlaneseq
        %v943 = vshrl.u32 %v942, 7
        %v944 = vsub.s32 %v941, %v943
        %v945 = vrot.slane %v931, %v944
        %v946 = vcombine.low %v922, %v928
        %v947 = vcombine.high %v922, %v928
        %v949 = vunpack.c.l.s4 1983009808
        %v950 = vunpack.c.0.s8 %v949
        %v951 = vlaneseq
        %v952 = vshrl.u32 %v951, 7
        %v953 = vsub.s32 %v950, %v952
        %v954 = vrot.slane %v946, %v953
        %v956 = vunpack.c.l.s4 1983009808
        %v957 = vunpack.c.0.s8 %v956
        %v958 = vlaneseq
        %v959 = vshrl.u32 %v958, 7
        %v960 = vsub.s32 %v957, %v959
        %v961 = vrot.slane %v947, %v960
        %v962 = vcombine.low %v938, %v954
        %v963 = vcombine.high %v938, %v954
        %v965 = vunpack.c.l.s4 1934713408
        %v966 = vunpack.c.0.s8 %v965
        %v967 = vlaneseq
        %v968 = vshrl.u32 %v967, 7
        %v969 = vsub.s32 %v966, %v968
        %v970 = vrot.slane %v962, %v969
        %v972 = vunpack.c.l.s4 1934713408
        %v973 = vunpack.c.0.s8 %v972
        %v974 = vlaneseq
        %v975 = vshrl.u32 %v974, 7
        %v976 = vsub.s32 %v973, %v975
        %v977 = vrot.slane %v963, %v976
        %v978 = vcombine.low %v945, %v961
        %v979 = vcombine.high %v945, %v961
        %v981 = vunpack.c.l.s4 1934713408
        %v982 = vunpack.c.0.s8 %v981
        %v983 = vlaneseq
        %v984 = vshrl.u32 %v983, 7
        %v985 = vsub.s32 %v982, %v984
        %v986 = vrot.slane %v978, %v985
        %v988 = vunpack.c.l.s4 1934713408
        %v989 = vunpack.c.0.s8 %v988
        %v990 = vlaneseq
        %v991 = vshrl.u32 %v990, 7
        %v992 = vsub.s32 %v989, %v991
        %v993 = vrot.slane %v979, %v992
        %v994 = vcombine.high %v970, 0.0
        %v995 = vcombine.high %v977, 0.0
        %v996 = vcombine.high %v986, 0.0
        %v997 = vcombine.high %v993, 0.0
        %v998 = vcombine.low %v970, %v977
        %v1000 = vunpack.c.l.s4 1983009808
        %v1001 = vunpack.c.0.s8 %v1000
        %v1002 = vlaneseq
        %v1003 = vshrl.u32 %v1002, 7
        %v1004 = vsub.s32 %v1001, %v1003
        %v1005 = vrot.slane %v998, %v1004
        %v1006 = vcombine.low %v994, %v995
        %v1008 = vunpack.c.l.s4 1983009808
        %v1009 = vunpack.c.0.s8 %v1008
        %v1010 = vlaneseq
        %v1011 = vshrl.u32 %v1010, 7
        %v1012 = vsub.s32 %v1009, %v1011
        %v1013 = vrot.slane %v1006, %v1012
        %v1014 = vcombine.low %v986, %v993
        %v1016 = vunpack.c.l.s4 1983009808
        %v1017 = vunpack.c.0.s8 %v1016
        %v1018 = vlaneseq
        %v1019 = vshrl.u32 %v1018, 7
        %v1020 = vsub.s32 %v1017, %v1019
        %v1021 = vrot.slane %v1014, %v1020
        %v1022 = vcombine.low %v996, %v997
        %v1024 = vunpack.c.l.s4 1983009808
        %v1025 = vunpack.c.0.s8 %v1024
        %v1026 = vlaneseq
        %v1027 = vshrl.u32 %v1026, 7
        %v1028 = vsub.s32 %v1025, %v1027
        %v1029 = vrot.slane %v1022, %v1028
        %v1030 = vcombine.low %v1005, %v1013
        %v1031 = vcombine.high %v1005, %v1013
        %v1033 = vunpack.c.l.s4 1934713408
        %v1034 = vunpack.c.0.s8 %v1033
        %v1035 = vlaneseq
        %v1036 = vshrl.u32 %v1035, 7
        %v1037 = vsub.s32 %v1034, %v1036
        %v1038 = vrot.slane %v1030, %v1037
        %v1040 = vunpack.c.l.s4 1934713408
        %v1041 = vunpack.c.0.s8 %v1040
        %v1042 = vlaneseq
        %v1043 = vshrl.u32 %v1042, 7
        %v1044 = vsub.s32 %v1041, %v1043
        %v1045 = vrot.slane %v1031, %v1044
        %v1046 = vcombine.low %v1021, %v1029
        %v1047 = vcombine.high %v1021, %v1029
        %v1049 = vunpack.c.l.s4 1934713408
        %v1050 = vunpack.c.0.s8 %v1049
        %v1051 = vlaneseq
        %v1052 = vshrl.u32 %v1051, 7
        %v1053 = vsub.s32 %v1050, %v1052
        %v1054 = vrot.slane %v1046, %v1053
        %v1056 = vunpack.c.l.s4 1934713408
        %v1057 = vunpack.c.0.s8 %v1056
        %v1058 = vlaneseq
        %v1059 = vshrl.u32 %v1058, 7
        %v1060 = vsub.s32 %v1057, %v1059
        %v1061 = vrot.slane %v1047, %v1060
        %v1062 = vcombine.low %v1038, %v1054
        %v1063 = vcombine.high %v1038, %v1054
        %v1064 = vcombine.low %v1045, %v1061
        %v1065 = vcombine.high %v1045, %v1061
        %1067 = vrot.lane.b32.xlu0 %v771, 120
        %v1068 = vpop.permute.xlu0 %1067
        %1070 = vrot.lane.b32.xlu0 %v771, 112
        %v1071 = vpop.permute.xlu0 %1070
        %1073 = vrot.lane.b32.xlu0 %v771, 104
        %v1074 = vpop.permute.xlu0 %1073
        %v1076 = vcombine.low %v771, %v1071
        %v1077 = vcombine.high %v771, %v1071
        %v1079 = vunpack.c.l.s4 1983009808
        %v1080 = vunpack.c.0.s8 %v1079
        %v1081 = vlaneseq
        %v1082 = vshrl.u32 %v1081, 7
        %v1083 = vsub.s32 %v1080, %v1082
        %v1084 = vrot.slane %v1076, %v1083
        %v1086 = vunpack.c.l.s4 1983009808
        %v1087 = vunpack.c.0.s8 %v1086
        %v1088 = vlaneseq
        %v1089 = vshrl.u32 %v1088, 7
        %v1090 = vsub.s32 %v1087, %v1089
        %v1091 = vrot.slane %v1077, %v1090
        %v1092 = vcombine.low %v1068, %v1074
        %v1093 = vcombine.high %v1068, %v1074
        %v1095 = vunpack.c.l.s4 1983009808
        %v1096 = vunpack.c.0.s8 %v1095
        %v1097 = vlaneseq
        %v1098 = vshrl.u32 %v1097, 7
        %v1099 = vsub.s32 %v1096, %v1098
        %v1100 = vrot.slane %v1092, %v1099
        %v1102 = vunpack.c.l.s4 1983009808
        %v1103 = vunpack.c.0.s8 %v1102
        %v1104 = vlaneseq
        %v1105 = vshrl.u32 %v1104, 7
        %v1106 = vsub.s32 %v1103, %v1105
        %v1107 = vrot.slane %v1093, %v1106
        %v1108 = vcombine.low %v1084, %v1100
        %v1109 = vcombine.high %v1084, %v1100
        %v1111 = vunpack.c.l.s4 1934713408
        %v1112 = vunpack.c.0.s8 %v1111
        %v1113 = vlaneseq
        %v1114 = vshrl.u32 %v1113, 7
        %v1115 = vsub.s32 %v1112, %v1114
        %v1116 = vrot.slane %v1108, %v1115
        %v1118 = vunpack.c.l.s4 1934713408
        %v1119 = vunpack.c.0.s8 %v1118
        %v1120 = vlaneseq
        %v1121 = vshrl.u32 %v1120, 7
        %v1122 = vsub.s32 %v1119, %v1121
        %v1123 = vrot.slane %v1109, %v1122
        %v1124 = vcombine.low %v1091, %v1107
        %v1125 = vcombine.high %v1091, %v1107
        %v1127 = vunpack.c.l.s4 1934713408
        %v1128 = vunpack.c.0.s8 %v1127
        %v1129 = vlaneseq
        %v1130 = vshrl.u32 %v1129, 7
        %v1131 = vsub.s32 %v1128, %v1130
        %v1132 = vrot.slane %v1124, %v1131
        %v1134 = vunpack.c.l.s4 1934713408
        %v1135 = vunpack.c.0.s8 %v1134
        %v1136 = vlaneseq
        %v1137 = vshrl.u32 %v1136, 7
        %v1138 = vsub.s32 %v1135, %v1137
        %v1139 = vrot.slane %v1125, %v1138
        %v1140 = vcombine.high %v1116, 0.0
        %v1141 = vcombine.high %v1123, 0.0
        %v1142 = vcombine.high %v1132, 0.0
        %v1143 = vcombine.high %v1139, 0.0
        %v1144 = vcombine.low %v1116, %v1123
        %v1146 = vunpack.c.l.s4 1983009808
        %v1147 = vunpack.c.0.s8 %v1146
        %v1148 = vlaneseq
        %v1149 = vshrl.u32 %v1148, 7
        %v1150 = vsub.s32 %v1147, %v1149
        %v1151 = vrot.slane %v1144, %v1150
        %v1152 = vcombine.low %v1140, %v1141
        %v1154 = vunpack.c.l.s4 1983009808
        %v1155 = vunpack.c.0.s8 %v1154
        %v1156 = vlaneseq
        %v1157 = vshrl.u32 %v1156, 7
        %v1158 = vsub.s32 %v1155, %v1157
        %v1159 = vrot.slane %v1152, %v1158
        %v1160 = vcombine.low %v1132, %v1139
        %v1162 = vunpack.c.l.s4 1983009808
        %v1163 = vunpack.c.0.s8 %v1162
        %v1164 = vlaneseq
        %v1165 = vshrl.u32 %v1164, 7
        %v1166 = vsub.s32 %v1163, %v1165
        %v1167 = vrot.slane %v1160, %v1166
        %v1168 = vcombine.low %v1142, %v1143
        %v1170 = vunpack.c.l.s4 1983009808
        %v1171 = vunpack.c.0.s8 %v1170
        %v1172 = vlaneseq
        %v1173 = vshrl.u32 %v1172, 7
        %v1174 = vsub.s32 %v1171, %v1173
        %v1175 = vrot.slane %v1168, %v1174
        %v1176 = vcombine.low %v1151, %v1159
        %v1177 = vcombine.high %v1151, %v1159
        %v1179 = vunpack.c.l.s4 1934713408
        %v1180 = vunpack.c.0.s8 %v1179
        %v1181 = vlaneseq
        %v1182 = vshrl.u32 %v1181, 7
        %v1183 = vsub.s32 %v1180, %v1182
        %v1184 = vrot.slane %v1176, %v1183
        %v1186 = vunpack.c.l.s4 1934713408
        %v1187 = vunpack.c.0.s8 %v1186
        %v1188 = vlaneseq
        %v1189 = vshrl.u32 %v1188, 7
        %v1190 = vsub.s32 %v1187, %v1189
        %v1191 = vrot.slane %v1177, %v1190
        %v1192 = vcombine.low %v1167, %v1175
        %v1193 = vcombine.high %v1167, %v1175
        %v1195 = vunpack.c.l.s4 1934713408
        %v1196 = vunpack.c.0.s8 %v1195
        %v1197 = vlaneseq
        %v1198 = vshrl.u32 %v1197, 7
        %v1199 = vsub.s32 %v1196, %v1198
        %v1200 = vrot.slane %v1192, %v1199
        %v1202 = vunpack.c.l.s4 1934713408
        %v1203 = vunpack.c.0.s8 %v1202
        %v1204 = vlaneseq
        %v1205 = vshrl.u32 %v1204, 7
        %v1206 = vsub.s32 %v1203, %v1205
        %v1207 = vrot.slane %v1193, %v1206
        %v1208 = vcombine.low %v1184, %v1200
        %v1209 = vcombine.high %v1184, %v1200
        %v1210 = vcombine.low %v1191, %v1207
        %v1211 = vcombine.high %v1191, %v1207
        %vm1212 = vcmask 64512
        %v1214 = vsel %vm1212, %v916, 0
        %v1217 = vsel %vm1212, %v1062, 0
        %1219 = vmatprep.subr.mxu0 0.0
        %1220 = vmatpush1.xpose.msra.mxu0 %v1217
        %1221 = vmatprep.subr.mxu0 0.0
        %1222 = vmatpush1.xpose.msra.mxu0 0.0
        %1223 = vmatprep.subr.mxu0 0.0
        %1224 = vmatpush1.xpose.msra.mxu0 0.0
        %1225 = vmatprep.subr.mxu0 0.0
        %1226 = vmatpush1.xpose.msra.mxu0 0.0
        %1227 = vmatprep.subr.mxu0 0.0
        %1228 = vmatpush1.xpose.msra.mxu0 0.0
        %1229 = vmatprep.subr.mxu0 0.0
        %1230 = vmatpush1.xpose.msra.mxu0 0.0
        %1231 = vmatprep.subr.mxu0 0.0
        %1232 = vmatpush1.xpose.msra.mxu0 0.0
        %1233 = vmatprep.subr.mxu0 0.0
        %1234 = vmatpush1.xpose.msra.mxu0 0.0
        %1235 = vmatprep.subr.mxu0 0.0
        %1236 = vmatpush1.xpose.msra.mxu0 0.0
        %1237 = vmatprep.subr.mxu0 0.0
        %1238 = vmatpush1.xpose.msra.mxu0 0.0
        %1239 = vmatprep.subr.mxu0 0.0
        %1240 = vmatpush1.xpose.msra.mxu0 0.0
        %1241 = vmatprep.subr.mxu0 0.0
        %1242 = vmatpush1.xpose.msra.mxu0 0.0
        %1243 = vmatprep.subr.mxu0 0.0
        %1244 = vmatpush1.xpose.msra.mxu0 0.0
        %1245 = vmatprep.subr.mxu0 0.0
        %1246 = vmatpush1.xpose.msra.mxu0 0.0
        %1247 = vmatprep.subr.mxu0 0.0
        %1248 = vmatpush1.xpose.msra.mxu0 0.0
        %1249 = vmatprep.subr.mxu0 0.0
        %1250 = vmatpush1.xpose.msra.mxu0 0.0
        %1251 = vmatprep.subr.mxu0 0.0
        %1252 = vmatpush1.xpose.msra.mxu0 0.0
        %1253 = vmatprep.subr.mxu0 0.0
        %1254 = vmatpush1.xpose.msra.mxu0 0.0
        %1255 = vmatprep.subr.mxu0 0.0
        %1256 = vmatpush1.xpose.msra.mxu0 0.0
        %1257 = vmatprep.subr.mxu0 0.0
        %1258 = vmatpush1.xpose.msra.mxu0 0.0
        %1259 = vmatprep.subr.mxu0 0.0
        %1260 = vmatpush1.xpose.msra.mxu0 0.0
        %1261 = vmatprep.subr.mxu0 0.0
        %1262 = vmatpush1.xpose.msra.mxu0 0.0
        %1263 = vmatprep.subr.mxu0 0.0
        %1264 = vmatpush1.xpose.msra.mxu0 0.0
        %1265 = vmatprep.subr.mxu0 0.0
        %1266 = vmatpush1.xpose.msra.mxu0 0.0
        %1267 = vmatprep.subr.mxu0 0.0
        %1268 = vmatpush1.xpose.msra.mxu0 0.0
        %1269 = vmatprep.subr.mxu0 0.0
        %1270 = vmatpush1.xpose.msra.mxu0 0.0
        %1271 = vmatprep.subr.mxu0 0.0
        %1272 = vmatpush1.xpose.msra.mxu0 0.0
        %1273 = vmatprep.subr.mxu0 0.0
        %1274 = vmatpush1.xpose.msra.mxu0 0.0
        %1275 = vmatprep.subr.mxu0 0.0
        %1276 = vmatpush1.xpose.msra.mxu0 0.0
        %1277 = vmatprep.subr.mxu0 0.0
        %1278 = vmatpush1.xpose.msra.mxu0 0.0
        %1279 = vmatprep.subr.mxu0 0.0
        %1280 = vmatpush1.xpose.msra.mxu0 0.0
        %1281 = vmatprep.subr.mxu0 0.0
        %1282 = vmatpush1.xpose.msra.mxu0 0.0
        %1283 = vmatprep.mubr.f32.mxu0 0.0
        %1284 = vmatmul.mubr.f32.gmra.mrb[0].mxu0 %v1214
        %v1285 = vpop.f32.mrb[0].mxu0
        %v1286 = vadd.f32 0.0, %v1285
        %v1287 = vpop.f32.mrb[0].mxu0
        %1288 = vdwg.mxu0
        %v1290 = vsel %vm1212, %v917, 0
        %v1293 = vsel %vm1212, %v1063, 0
        %1295 = vmatprep.subr.mxu0 0.0
        %1296 = vmatpush1.xpose.msra.mxu0 %v1293
        %1297 = vmatprep.subr.mxu0 0.0
        %1298 = vmatpush1.xpose.msra.mxu0 0.0
        %1299 = vmatprep.subr.mxu0 0.0
        %1300 = vmatpush1.xpose.msra.mxu0 0.0
        %1301 = vmatprep.subr.mxu0 0.0
        %1302 = vmatpush1.xpose.msra.mxu0 0.0
        %1303 = vmatprep.subr.mxu0 0.0
        %1304 = vmatpush1.xpose.msra.mxu0 0.0
        %1305 = vmatprep.subr.mxu0 0.0
        %1306 = vmatpush1.xpose.msra.mxu0 0.0
        %1307 = vmatprep.subr.mxu0 0.0
        %1308 = vmatpush1.xpose.msra.mxu0 0.0
        %1309 = vmatprep.subr.mxu0 0.0
        %1310 = vmatpush1.xpose.msra.mxu0 0.0
        %1311 = vmatprep.subr.mxu0 0.0
        %1312 = vmatpush1.xpose.msra.mxu0 0.0
        %1313 = vmatprep.subr.mxu0 0.0
        %1314 = vmatpush1.xpose.msra.mxu0 0.0
        %1315 = vmatprep.subr.mxu0 0.0
        %1316 = vmatpush1.xpose.msra.mxu0 0.0
        %1317 = vmatprep.subr.mxu0 0.0
        %1318 = vmatpush1.xpose.msra.mxu0 0.0
        %1319 = vmatprep.subr.mxu0 0.0
        %1320 = vmatpush1.xpose.msra.mxu0 0.0
        %1321 = vmatprep.subr.mxu0 0.0
        %1322 = vmatpush1.xpose.msra.mxu0 0.0
        %1323 = vmatprep.subr.mxu0 0.0
        %1324 = vmatpush1.xpose.msra.mxu0 0.0
        %1325 = vmatprep.subr.mxu0 0.0
        %1326 = vmatpush1.xpose.msra.mxu0 0.0
        %1327 = vmatprep.subr.mxu0 0.0
        %1328 = vmatpush1.xpose.msra.mxu0 0.0
        %1329 = vmatprep.subr.mxu0 0.0
        %1330 = vmatpush1.xpose.msra.mxu0 0.0
        %1331 = vmatprep.subr.mxu0 0.0
        %1332 = vmatpush1.xpose.msra.mxu0 0.0
        %1333 = vmatprep.subr.mxu0 0.0
        %1334 = vmatpush1.xpose.msra.mxu0 0.0
        %1335 = vmatprep.subr.mxu0 0.0
        %1336 = vmatpush1.xpose.msra.mxu0 0.0
        %1337 = vmatprep.subr.mxu0 0.0
        %1338 = vmatpush1.xpose.msra.mxu0 0.0
        %1339 = vmatprep.subr.mxu0 0.0
        %1340 = vmatpush1.xpose.msra.mxu0 0.0
        %1341 = vmatprep.subr.mxu0 0.0
        %1342 = vmatpush1.xpose.msra.mxu0 0.0
        %1343 = vmatprep.subr.mxu0 0.0
        %1344 = vmatpush1.xpose.msra.mxu0 0.0
        %1345 = vmatprep.subr.mxu0 0.0
        %1346 = vmatpush1.xpose.msra.mxu0 0.0
        %1347 = vmatprep.subr.mxu0 0.0
        %1348 = vmatpush1.xpose.msra.mxu0 0.0
        %1349 = vmatprep.subr.mxu0 0.0
        %1350 = vmatpush1.xpose.msra.mxu0 0.0
        %1351 = vmatprep.subr.mxu0 0.0
        %1352 = vmatpush1.xpose.msra.mxu0 0.0
        %1353 = vmatprep.subr.mxu0 0.0
        %1354 = vmatpush1.xpose.msra.mxu0 0.0
        %1355 = vmatprep.subr.mxu0 0.0
        %1356 = vmatpush1.xpose.msra.mxu0 0.0
        %1357 = vmatprep.subr.mxu0 0.0
        %1358 = vmatpush1.xpose.msra.mxu0 0.0
        %1359 = vmatprep.mubr.f32.mxu0 0.0
        %1360 = vmatmul.mubr.f32.gmra.mrb[0].mxu0 %v1290
        %v1361 = vpop.f32.mrb[0].mxu0
        %v1362 = vadd.f32 0.0, %v1361
        %v1363 = vpop.f32.mrb[0].mxu0
        %1364 = vdwg.mxu0
        %v1366 = vsel %vm1212, %v918, 0
        %v1369 = vsel %vm1212, %v1064, 0
        %1371 = vmatprep.subr.mxu0 0.0
        %1372 = vmatpush1.xpose.msra.mxu0 %v1369
        %1373 = vmatprep.subr.mxu0 0.0
        %1374 = vmatpush1.xpose.msra.mxu0 0.0
        %1375 = vmatprep.subr.mxu0 0.0
        %1376 = vmatpush1.xpose.msra.mxu0 0.0
        %1377 = vmatprep.subr.mxu0 0.0
        %1378 = vmatpush1.xpose.msra.mxu0 0.0
        %1379 = vmatprep.subr.mxu0 0.0
        %1380 = vmatpush1.xpose.msra.mxu0 0.0
        %1381 = vmatprep.subr.mxu0 0.0
        %1382 = vmatpush1.xpose.msra.mxu0 0.0
        %1383 = vmatprep.subr.mxu0 0.0
        %1384 = vmatpush1.xpose.msra.mxu0 0.0
        %1385 = vmatprep.subr.mxu0 0.0
        %1386 = vmatpush1.xpose.msra.mxu0 0.0
        %1387 = vmatprep.subr.mxu0 0.0
        %1388 = vmatpush1.xpose.msra.mxu0 0.0
        %1389 = vmatprep.subr.mxu0 0.0
        %1390 = vmatpush1.xpose.msra.mxu0 0.0
        %1391 = vmatprep.subr.mxu0 0.0
        %1392 = vmatpush1.xpose.msra.mxu0 0.0
        %1393 = vmatprep.subr.mxu0 0.0
        %1394 = vmatpush1.xpose.msra.mxu0 0.0
        %1395 = vmatprep.subr.mxu0 0.0
        %1396 = vmatpush1.xpose.msra.mxu0 0.0
        %1397 = vmatprep.subr.mxu0 0.0
        %1398 = vmatpush1.xpose.msra.mxu0 0.0
        %1399 = vmatprep.subr.mxu0 0.0
        %1400 = vmatpush1.xpose.msra.mxu0 0.0
        %1401 = vmatprep.subr.mxu0 0.0
        %1402 = vmatpush1.xpose.msra.mxu0 0.0
        %1403 = vmatprep.subr.mxu0 0.0
        %1404 = vmatpush1.xpose.msra.mxu0 0.0
        %1405 = vmatprep.subr.mxu0 0.0
        %1406 = vmatpush1.xpose.msra.mxu0 0.0
        %1407 = vmatprep.subr.mxu0 0.0
        %1408 = vmatpush1.xpose.msra.mxu0 0.0
        %1409 = vmatprep.subr.mxu0 0.0
        %1410 = vmatpush1.xpose.msra.mxu0 0.0
        %1411 = vmatprep.subr.mxu0 0.0
        %1412 = vmatpush1.xpose.msra.mxu0 0.0
        %1413 = vmatprep.subr.mxu0 0.0
        %1414 = vmatpush1.xpose.msra.mxu0 0.0
        %1415 = vmatprep.subr.mxu0 0.0
        %1416 = vmatpush1.xpose.msra.mxu0 0.0
        %1417 = vmatprep.subr.mxu0 0.0
        %1418 = vmatpush1.xpose.msra.mxu0 0.0
        %1419 = vmatprep.subr.mxu0 0.0
        %1420 = vmatpush1.xpose.msra.mxu0 0.0
        %1421 = vmatprep.subr.mxu0 0.0
        %1422 = vmatpush1.xpose.msra.mxu0 0.0
        %1423 = vmatprep.subr.mxu0 0.0
        %1424 = vmatpush1.xpose.msra.mxu0 0.0
        %1425 = vmatprep.subr.mxu0 0.0
        %1426 = vmatpush1.xpose.msra.mxu0 0.0
        %1427 = vmatprep.subr.mxu0 0.0
        %1428 = vmatpush1.xpose.msra.mxu0 0.0
        %1429 = vmatprep.subr.mxu0 0.0
        %1430 = vmatpush1.xpose.msra.mxu0 0.0
        %1431 = vmatprep.subr.mxu0 0.0
        %1432 = vmatpush1.xpose.msra.mxu0 0.0
        %1433 = vmatprep.subr.mxu0 0.0
        %1434 = vmatpush1.xpose.msra.mxu0 0.0
        %1435 = vmatprep.mubr.f32.mxu0 0.0
        %1436 = vmatmul.mubr.f32.gmra.mrb[0].mxu0 %v1366
        %v1437 = vpop.f32.mrb[0].mxu0
        %v1438 = vadd.f32 0.0, %v1437
        %v1439 = vpop.f32.mrb[0].mxu0
        %1440 = vdwg.mxu0
        %v1442 = vsel %vm1212, %v919, 0
        %v1445 = vsel %vm1212, %v1065, 0
        %1447 = vmatprep.subr.mxu0 0.0
        %1448 = vmatpush1.xpose.msra.mxu0 %v1445
        %1449 = vmatprep.subr.mxu0 0.0
        %1450 = vmatpush1.xpose.msra.mxu0 0.0
        %1451 = vmatprep.subr.mxu0 0.0
        %1452 = vmatpush1.xpose.msra.mxu0 0.0
        %1453 = vmatprep.subr.mxu0 0.0
        %1454 = vmatpush1.xpose.msra.mxu0 0.0
        %1455 = vmatprep.subr.mxu0 0.0
        %1456 = vmatpush1.xpose.msra.mxu0 0.0
        %1457 = vmatprep.subr.mxu0 0.0
        %1458 = vmatpush1.xpose.msra.mxu0 0.0
        %1459 = vmatprep.subr.mxu0 0.0
        %1460 = vmatpush1.xpose.msra.mxu0 0.0
        %1461 = vmatprep.subr.mxu0 0.0
        %1462 = vmatpush1.xpose.msra.mxu0 0.0
        %1463 = vmatprep.subr.mxu0 0.0
        %1464 = vmatpush1.xpose.msra.mxu0 0.0
        %1465 = vmatprep.subr.mxu0 0.0
        %1466 = vmatpush1.xpose.msra.mxu0 0.0
        %1467 = vmatprep.subr.mxu0 0.0
        %1468 = vmatpush1.xpose.msra.mxu0 0.0
        %1469 = vmatprep.subr.mxu0 0.0
        %1470 = vmatpush1.xpose.msra.mxu0 0.0
        %1471 = vmatprep.subr.mxu0 0.0
        %1472 = vmatpush1.xpose.msra.mxu0 0.0
        %1473 = vmatprep.subr.mxu0 0.0
        %1474 = vmatpush1.xpose.msra.mxu0 0.0
        %1475 = vmatprep.subr.mxu0 0.0
        %1476 = vmatpush1.xpose.msra.mxu0 0.0
        %1477 = vmatprep.subr.mxu0 0.0
        %1478 = vmatpush1.xpose.msra.mxu0 0.0
        %1479 = vmatprep.subr.mxu0 0.0
        %1480 = vmatpush1.xpose.msra.mxu0 0.0
        %1481 = vmatprep.subr.mxu0 0.0
        %1482 = vmatpush1.xpose.msra.mxu0 0.0
        %1483 = vmatprep.subr.mxu0 0.0
        %1484 = vmatpush1.xpose.msra.mxu0 0.0
        %1485 = vmatprep.subr.mxu0 0.0
        %1486 = vmatpush1.xpose.msra.mxu0 0.0
        %1487 = vmatprep.subr.mxu0 0.0
        %1488 = vmatpush1.xpose.msra.mxu0 0.0
        %1489 = vmatprep.subr.mxu0 0.0
        %1490 = vmatpush1.xpose.msra.mxu0 0.0
        %1491 = vmatprep.subr.mxu0 0.0
        %1492 = vmatpush1.xpose.msra.mxu0 0.0
        %1493 = vmatprep.subr.mxu0 0.0
        %1494 = vmatpush1.xpose.msra.mxu0 0.0
        %1495 = vmatprep.subr.mxu0 0.0
        %1496 = vmatpush1.xpose.msra.mxu0 0.0
        %1497 = vmatprep.subr.mxu0 0.0
        %1498 = vmatpush1.xpose.msra.mxu0 0.0
        %1499 = vmatprep.subr.mxu0 0.0
        %1500 = vmatpush1.xpose.msra.mxu0 0.0
        %1501 = vmatprep.subr.mxu0 0.0
        %1502 = vmatpush1.xpose.msra.mxu0 0.0
        %1503 = vmatprep.subr.mxu0 0.0
        %1504 = vmatpush1.xpose.msra.mxu0 0.0
        %1505 = vmatprep.subr.mxu0 0.0
        %1506 = vmatpush1.xpose.msra.mxu0 0.0
        %1507 = vmatprep.subr.mxu0 0.0
        %1508 = vmatpush1.xpose.msra.mxu0 0.0
        %1509 = vmatprep.subr.mxu0 0.0
        %1510 = vmatpush1.xpose.msra.mxu0 0.0
        %1511 = vmatprep.mubr.f32.mxu0 0.0
        %1512 = vmatmul.mubr.f32.gmra.mrb[0].mxu0 %v1442
        %v1513 = vpop.f32.mrb[0].mxu0
        %v1514 = vadd.f32 0.0, %v1513
        %v1515 = vpop.f32.mrb[0].mxu0
        %1516 = vdwg.mxu0
        %v1517 = vmul.f32 %v1286, 0.35355338
        %v1518 = vmul.f32 %v1362, 0.35355338
        %v1519 = vmul.f32 %v1438, 0.35355338
        %v1520 = vmul.f32 %v1514, 0.35355338
        %v1521 = vsel %vm1212, %v1517, -inf
        %1522 = vmax.xlane.f32.xlu0 %v1521
        %v1523 = vpop.xlane.xlu0 %1522
        %v1524 = vsel %vm1212, %v1518, -inf
        %1525 = vmax.xlane.f32.xlu0 %v1524
        %v1526 = vpop.xlane.xlu0 %1525
        %v1527 = vsel %vm1212, %v1519, -inf
        %1528 = vmax.xlane.f32.xlu0 %v1527
        %v1529 = vpop.xlane.xlu0 %1528
        %v1530 = vsel %vm1212, %v1520, -inf
        %1531 = vmax.xlane.f32.xlu0 %v1530
        %v1532 = vpop.xlane.xlu0 %1531
        %v1533 = vsub.f32 %v1517, %v1523
        %v1534 = vsub.f32 %v1518, %v1526
        %v1535 = vsub.f32 %v1519, %v1529
        %v1536 = vsub.f32 %v1520, %v1532
        %v1537 = vmul.f32 %v1533, 1.442695
        %v1538 = vpow.pop %v1537
        %v1539 = vmul.f32 %v1534, 1.442695
        %v1540 = vpow.pop %v1539
        %v1541 = vmul.f32 %v1535, 1.442695
        %v1542 = vpow.pop %v1541
        %v1543 = vmul.f32 %v1536, 1.442695
        %v1544 = vpow.pop %v1543
        %v1545 = vsel %vm1212, %v1538, 0.0
        %1546 = vadd.xlane.f32.xlu0 %v1545
        %v1547 = vpop.xlane.xlu0 %1546
        %v1548 = vsel %vm1212, %v1540, 0.0
        %1549 = vadd.xlane.f32.xlu0 %v1548
        %v1550 = vpop.xlane.xlu0 %1549
        %v1551 = vsel %vm1212, %v1542, 0.0
        %1552 = vadd.xlane.f32.xlu0 %v1551
        %v1553 = vpop.xlane.xlu0 %1552
        %v1554 = vsel %vm1212, %v1544, 0.0
        %1555 = vadd.xlane.f32.xlu0 %v1554
        %v1556 = vpop.xlane.xlu0 %1555
        %v1557 = vrcp.pop %v1547
        %v1558 = vrcp.pop %v1550
        %v1559 = vrcp.pop %v1553
        %v1560 = vrcp.pop %v1556
        %v1561 = vmul.f32 %v1538, %v1557
        %v1562 = vmul.f32 %v1540, %v1558
        %v1563 = vmul.f32 %v1542, %v1559
        %v1564 = vmul.f32 %v1544, %v1560
        %v1566 = vsel %vm1212, %v1561, 0
        %1568 = vmatprep.subr.mxu0 0.0
        %1569 = vmatpush1.msra.mxu0 %v1208
        %1570 = vmatprep.subr.mxu0 0.0
        %1571 = vmatpush1.msra.mxu0 0.0
        %1572 = vmatprep.subr.mxu0 0.0
        %1573 = vmatpush1.msra.mxu0 0.0
        %1574 = vmatprep.subr.mxu0 0.0
        %1575 = vmatpush1.msra.mxu0 0.0
        %1576 = vmatprep.subr.mxu0 0.0
        %1577 = vmatpush1.msra.mxu0 0.0
        %1578 = vmatprep.subr.mxu0 0.0
        %1579 = vmatpush1.msra.mxu0 0.0
        %1580 = vmatprep.subr.mxu0 0.0
        %1581 = vmatpush1.msra.mxu0 0.0
        %1582 = vmatprep.subr.mxu0 0.0
        %1583 = vmatpush1.msra.mxu0 0.0
        %1584 = vmatprep.subr.mxu0 0.0
        %1585 = vmatpush1.msra.mxu0 0.0
        %1586 = vmatprep.subr.mxu0 0.0
        %1587 = vmatpush1.msra.mxu0 0.0
        %1588 = vmatprep.subr.mxu0 0.0
        %1589 = vmatpush1.msra.mxu0 0.0
        %1590 = vmatprep.subr.mxu0 0.0
        %1591 = vmatpush1.msra.mxu0 0.0
        %1592 = vmatprep.subr.mxu0 0.0
        %1593 = vmatpush1.msra.mxu0 0.0
        %1594 = vmatprep.subr.mxu0 0.0
        %1595 = vmatpush1.msra.mxu0 0.0
        %1596 = vmatprep.subr.mxu0 0.0
        %1597 = vmatpush1.msra.mxu0 0.0
        %1598 = vmatprep.subr.mxu0 0.0
        %1599 = vmatpush1.msra.mxu0 0.0
        %1600 = vmatprep.subr.mxu0 0.0
        %1601 = vmatpush1.msra.mxu0 0.0
        %1602 = vmatprep.subr.mxu0 0.0
        %1603 = vmatpush1.msra.mxu0 0.0
        %1604 = vmatprep.subr.mxu0 0.0
        %1605 = vmatpush1.msra.mxu0 0.0
        %1606 = vmatprep.subr.mxu0 0.0
        %1607 = vmatpush1.msra.mxu0 0.0
        %1608 = vmatprep.subr.mxu0 0.0
        %1609 = vmatpush1.msra.mxu0 0.0
        %1610 = vmatprep.subr.mxu0 0.0
        %1611 = vmatpush1.msra.mxu0 0.0
        %1612 = vmatprep.subr.mxu0 0.0
        %1613 = vmatpush1.msra.mxu0 0.0
        %1614 = vmatprep.subr.mxu0 0.0
        %1615 = vmatpush1.msra.mxu0 0.0
        %1616 = vmatprep.subr.mxu0 0.0
        %1617 = vmatpush1.msra.mxu0 0.0
        %1618 = vmatprep.subr.mxu0 0.0
        %1619 = vmatpush1.msra.mxu0 0.0
        %1620 = vmatprep.subr.mxu0 0.0
        %1621 = vmatpush1.msra.mxu0 0.0
        %1622 = vmatprep.subr.mxu0 0.0
        %1623 = vmatpush1.msra.mxu0 0.0
        %1624 = vmatprep.subr.mxu0 0.0
        %1625 = vmatpush1.msra.mxu0 0.0
        %1626 = vmatprep.subr.mxu0 0.0
        %1627 = vmatpush1.msra.mxu0 0.0
        %1628 = vmatprep.subr.mxu0 0.0
        %1629 = vmatpush1.msra.mxu0 0.0
        %1630 = vmatprep.subr.mxu0 0.0
        %1631 = vmatpush1.msra.mxu0 0.0
        %1632 = vmatprep.mubr.f32.mxu0 0.0
        %1633 = vmatmul.mubr.f32.gmra.mrb[0].mxu0 %v1566
        %v1634 = vpop.f32.mrb[0].mxu0
        %v1635 = vadd.f32 0.0, %v1634
        %v1636 = vpop.f32.mrb[0].mxu0
        %1637 = vdwg.mxu0
        %v1639 = vsel %vm1212, %v1562, 0
        %1641 = vmatprep.subr.mxu0 0.0
        %1642 = vmatpush1.msra.mxu0 %v1209
        %1643 = vmatprep.subr.mxu0 0.0
        %1644 = vmatpush1.msra.mxu0 0.0
        %1645 = vmatprep.subr.mxu0 0.0
        %1646 = vmatpush1.msra.mxu0 0.0
        %1647 = vmatprep.subr.mxu0 0.0
        %1648 = vmatpush1.msra.mxu0 0.0
        %1649 = vmatprep.subr.mxu0 0.0
        %1650 = vmatpush1.msra.mxu0 0.0
        %1651 = vmatprep.subr.mxu0 0.0
        %1652 = vmatpush1.msra.mxu0 0.0
        %1653 = vmatprep.subr.mxu0 0.0
        %1654 = vmatpush1.msra.mxu0 0.0
        %1655 = vmatprep.subr.mxu0 0.0
        %1656 = vmatpush1.msra.mxu0 0.0
        %1657 = vmatprep.subr.mxu0 0.0
        %1658 = vmatpush1.msra.mxu0 0.0
        %1659 = vmatprep.subr.mxu0 0.0
        %1660 = vmatpush1.msra.mxu0 0.0
        %1661 = vmatprep.subr.mxu0 0.0
        %1662 = vmatpush1.msra.mxu0 0.0
        %1663 = vmatprep.subr.mxu0 0.0
        %1664 = vmatpush1.msra.mxu0 0.0
        %1665 = vmatprep.subr.mxu0 0.0
        %1666 = vmatpush1.msra.mxu0 0.0
        %1667 = vmatprep.subr.mxu0 0.0
        %1668 = vmatpush1.msra.mxu0 0.0
        %1669 = vmatprep.subr.mxu0 0.0
        %1670 = vmatpush1.msra.mxu0 0.0
        %1671 = vmatprep.subr.mxu0 0.0
        %1672 = vmatpush1.msra.mxu0 0.0
        %1673 = vmatprep.subr.mxu0 0.0
        %1674 = vmatpush1.msra.mxu0 0.0
        %1675 = vmatprep.subr.mxu0 0.0
        %1676 = vmatpush1.msra.mxu0 0.0
        %1677 = vmatprep.subr.mxu0 0.0
        %1678 = vmatpush1.msra.mxu0 0.0
        %1679 = vmatprep.subr.mxu0 0.0
        %1680 = vmatpush1.msra.mxu0 0.0
        %1681 = vmatprep.subr.mxu0 0.0
        %1682 = vmatpush1.msra.mxu0 0.0
        %1683 = vmatprep.subr.mxu0 0.0
        %1684 = vmatpush1.msra.mxu0 0.0
        %1685 = vmatprep.subr.mxu0 0.0
        %1686 = vmatpush1.msra.mxu0 0.0
        %1687 = vmatprep.subr.mxu0 0.0
        %1688 = vmatpush1.msra.mxu0 0.0
        %1689 = vmatprep.subr.mxu0 0.0
        %1690 = vmatpush1.msra.mxu0 0.0
        %1691 = vmatprep.subr.mxu0 0.0
        %1692 = vmatpush1.msra.mxu0 0.0
        %1693 = vmatprep.subr.mxu0 0.0
        %1694 = vmatpush1.msra.mxu0 0.0
        %1695 = vmatprep.subr.mxu0 0.0
        %1696 = vmatpush1.msra.mxu0 0.0
        %1697 = vmatprep.subr.mxu0 0.0
        %1698 = vmatpush1.msra.mxu0 0.0
        %1699 = vmatprep.subr.mxu0 0.0
        %1700 = vmatpush1.msra.mxu0 0.0
        %1701 = vmatprep.subr.mxu0 0.0
        %1702 = vmatpush1.msra.mxu0 0.0
        %1703 = vmatprep.subr.mxu0 0.0
        %1704 = vmatpush1.msra.mxu0 0.0
        %1705 = vmatprep.mubr.f32.mxu0 0.0
        %1706 = vmatmul.mubr.f32.gmra.mrb[0].mxu0 %v1639
        %v1707 = vpop.f32.mrb[0].mxu0
        %v1708 = vadd.f32 0.0, %v1707
        %v1709 = vpop.f32.mrb[0].mxu0
        %1710 = vdwg.mxu0
        %v1712 = vsel %vm1212, %v1563, 0
        %1714 = vmatprep.subr.mxu0 0.0
        %1715 = vmatpush1.msra.mxu0 %v1210
        %1716 = vmatprep.subr.mxu0 0.0
        %1717 = vmatpush1.msra.mxu0 0.0
        %1718 = vmatprep.subr.mxu0 0.0
        %1719 = vmatpush1.msra.mxu0 0.0
        %1720 = vmatprep.subr.mxu0 0.0
        %1721 = vmatpush1.msra.mxu0 0.0
        %1722 = vmatprep.subr.mxu0 0.0
        %1723 = vmatpush1.msra.mxu0 0.0
        %1724 = vmatprep.subr.mxu0 0.0
        %1725 = vmatpush1.msra.mxu0 0.0
        %1726 = vmatprep.subr.mxu0 0.0
        %1727 = vmatpush1.msra.mxu0 0.0
        %1728 = vmatprep.subr.mxu0 0.0
        %1729 = vmatpush1.msra.mxu0 0.0
        %1730 = vmatprep.subr.mxu0 0.0
        %1731 = vmatpush1.msra.mxu0 0.0
        %1732 = vmatprep.subr.mxu0 0.0
        %1733 = vmatpush1.msra.mxu0 0.0
        %1734 = vmatprep.subr.mxu0 0.0
        %1735 = vmatpush1.msra.mxu0 0.0
        %1736 = vmatprep.subr.mxu0 0.0
        %1737 = vmatpush1.msra.mxu0 0.0
        %1738 = vmatprep.subr.mxu0 0.0
        %1739 = vmatpush1.msra.mxu0 0.0
        %1740 = vmatprep.subr.mxu0 0.0
        %1741 = vmatpush1.msra.mxu0 0.0
        %1742 = vmatprep.subr.mxu0 0.0
        %1743 = vmatpush1.msra.mxu0 0.0
        %1744 = vmatprep.subr.mxu0 0.0
        %1745 = vmatpush1.msra.mxu0 0.0
        %1746 = vmatprep.subr.mxu0 0.0
        %1747 = vmatpush1.msra.mxu0 0.0
        %1748 = vmatprep.subr.mxu0 0.0
        %1749 = vmatpush1.msra.mxu0 0.0
        %1750 = vmatprep.subr.mxu0 0.0
        %1751 = vmatpush1.msra.mxu0 0.0
        %1752 = vmatprep.subr.mxu0 0.0
        %1753 = vmatpush1.msra.mxu0 0.0
        %1754 = vmatprep.subr.mxu0 0.0
        %1755 = vmatpush1.msra.mxu0 0.0
        %1756 = vmatprep.subr.mxu0 0.0
        %1757 = vmatpush1.msra.mxu0 0.0
        %1758 = vmatprep.subr.mxu0 0.0
        %1759 = vmatpush1.msra.mxu0 0.0
        %1760 = vmatprep.subr.mxu0 0.0
        %1761 = vmatpush1.msra.mxu0 0.0
        %1762 = vmatprep.subr.mxu0 0.0
        %1763 = vmatpush1.msra.mxu0 0.0
        %1764 = vmatprep.subr.mxu0 0.0
        %1765 = vmatpush1.msra.mxu0 0.0
        %1766 = vmatprep.subr.mxu0 0.0
        %1767 = vmatpush1.msra.mxu0 0.0
        %1768 = vmatprep.subr.mxu0 0.0
        %1769 = vmatpush1.msra.mxu0 0.0
        %1770 = vmatprep.subr.mxu0 0.0
        %1771 = vmatpush1.msra.mxu0 0.0
        %1772 = vmatprep.subr.mxu0 0.0
        %1773 = vmatpush1.msra.mxu0 0.0
        %1774 = vmatprep.subr.mxu0 0.0
        %1775 = vmatpush1.msra.mxu0 0.0
        %1776 = vmatprep.subr.mxu0 0.0
        %1777 = vmatpush1.msra.mxu0 0.0
        %1778 = vmatprep.mubr.f32.mxu0 0.0
        %1779 = vmatmul.mubr.f32.gmra.mrb[0].mxu0 %v1712
        %v1780 = vpop.f32.mrb[0].mxu0
        %v1781 = vadd.f32 0.0, %v1780
        %v1782 = vpop.f32.mrb[0].mxu0
        %1783 = vdwg.mxu0
        %v1785 = vsel %vm1212, %v1564, 0
        %1787 = vmatprep.subr.mxu0 0.0
        %1788 = vmatpush1.msra.mxu0 %v1211
        %1789 = vmatprep.subr.mxu0 0.0
        %1790 = vmatpush1.msra.mxu0 0.0
        %1791 = vmatprep.subr.mxu0 0.0
        %1792 = vmatpush1.msra.mxu0 0.0
        %1793 = vmatprep.subr.mxu0 0.0
        %1794 = vmatpush1.msra.mxu0 0.0
        %1795 = vmatprep.subr.mxu0 0.0
        %1796 = vmatpush1.msra.mxu0 0.0
        %1797 = vmatprep.subr.mxu0 0.0
        %1798 = vmatpush1.msra.mxu0 0.0
        %1799 = vmatprep.subr.mxu0 0.0
        %1800 = vmatpush1.msra.mxu0 0.0
        %1801 = vmatprep.subr.mxu0 0.0
        %1802 = vmatpush1.msra.mxu0 0.0
        %1803 = vmatprep.subr.mxu0 0.0
        %1804 = vmatpush1.msra.mxu0 0.0
        %1805 = vmatprep.subr.mxu0 0.0
        %1806 = vmatpush1.msra.mxu0 0.0
        %1807 = vmatprep.subr.mxu0 0.0
        %1808 = vmatpush1.msra.mxu0 0.0
        %1809 = vmatprep.subr.mxu0 0.0
        %1810 = vmatpush1.msra.mxu0 0.0
        %1811 = vmatprep.subr.mxu0 0.0
        %1812 = vmatpush1.msra.mxu0 0.0
        %1813 = vmatprep.subr.mxu0 0.0
        %1814 = vmatpush1.msra.mxu0 0.0
        %1815 = vmatprep.subr.mxu0 0.0
        %1816 = vmatpush1.msra.mxu0 0.0
        %1817 = vmatprep.subr.mxu0 0.0
        %1818 = vmatpush1.msra.mxu0 0.0
        %1819 = vmatprep.subr.mxu0 0.0
        %1820 = vmatpush1.msra.mxu0 0.0
        %1821 = vmatprep.subr.mxu0 0.0
        %1822 = vmatpush1.msra.mxu0 0.0
        %1823 = vmatprep.subr.mxu0 0.0
        %1824 = vmatpush1.msra.mxu0 0.0
        %1825 = vmatprep.subr.mxu0 0.0
        %1826 = vmatpush1.msra.mxu0 0.0
        %1827 = vmatprep.subr.mxu0 0.0
        %1828 = vmatpush1.msra.mxu0 0.0
        %1829 = vmatprep.subr.mxu0 0.0
        %1830 = vmatpush1.msra.mxu0 0.0
        %1831 = vmatprep.subr.mxu0 0.0
        %1832 = vmatpush1.msra.mxu0 0.0
        %1833 = vmatprep.subr.mxu0 0.0
        %1834 = vmatpush1.msra.mxu0 0.0
        %1835 = vmatprep.subr.mxu0 0.0
        %1836 = vmatpush1.msra.mxu0 0.0
        %1837 = vmatprep.subr.mxu0 0.0
        %1838 = vmatpush1.msra.mxu0 0.0
        %1839 = vmatprep.subr.mxu0 0.0
        %1840 = vmatpush1.msra.mxu0 0.0
        %1841 = vmatprep.subr.mxu0 0.0
        %1842 = vmatpush1.msra.mxu0 0.0
        %1843 = vmatprep.subr.mxu0 0.0
        %1844 = vmatpush1.msra.mxu0 0.0
        %1845 = vmatprep.subr.mxu0 0.0
        %1846 = vmatpush1.msra.mxu0 0.0
        %1847 = vmatprep.subr.mxu0 0.0
        %1848 = vmatpush1.msra.mxu0 0.0
        %1849 = vmatprep.subr.mxu0 0.0
        %1850 = vmatpush1.msra.mxu0 0.0
        %1851 = vmatprep.mubr.f32.mxu0 0.0
        %1852 = vmatmul.mubr.f32.gmra.mrb[0].mxu0 %v1785
        %v1853 = vpop.f32.mrb[0].mxu0
        %v1854 = vadd.f32 0.0, %v1853
        %v1855 = vpop.f32.mrb[0].mxu0
        %1856 = vdwg.mxu0
        %v1857 = vcombine.low %v1635, %v1781
        %v1858 = vcombine.high %v1635, %v1781
        %v1860 = vunpack.c.l.s4 1983009808
        %v1861 = vunpack.c.0.s8 %v1860
        %v1862 = vlaneseq
        %v1863 = vshrl.u32 %v1862, 7
        %v1864 = vsub.s32 %v1861, %v1863
        %v1865 = vrot.slane %v1857, %v1864
        %v1867 = vunpack.c.l.s4 1983009808
        %v1868 = vunpack.c.0.s8 %v1867
        %v1869 = vlaneseq
        %v1870 = vshrl.u32 %v1869, 7
        %v1871 = vsub.s32 %v1868, %v1870
        %v1872 = vrot.slane %v1858, %v1871
        %v1873 = vcombine.low %v1708, %v1854
        %v1874 = vcombine.high %v1708, %v1854
        %v1876 = vunpack.c.l.s4 1983009808
        %v1877 = vunpack.c.0.s8 %v1876
        %v1878 = vlaneseq
        %v1879 = vshrl.u32 %v1878, 7
        %v1880 = vsub.s32 %v1877, %v1879
        %v1881 = vrot.slane %v1873, %v1880
        %v1883 = vunpack.c.l.s4 1983009808
        %v1884 = vunpack.c.0.s8 %v1883
        %v1885 = vlaneseq
        %v1886 = vshrl.u32 %v1885, 7
        %v1887 = vsub.s32 %v1884, %v1886
        %v1888 = vrot.slane %v1874, %v1887
        %v1889 = vcombine.low %v1865, %v1881
        %v1890 = vcombine.high %v1865, %v1881
        %v1892 = vunpack.c.l.s4 1934713408
        %v1893 = vunpack.c.0.s8 %v1892
        %v1894 = vlaneseq
        %v1895 = vshrl.u32 %v1894, 7
        %v1896 = vsub.s32 %v1893, %v1895
        %v1897 = vrot.slane %v1889, %v1896
        %v1899 = vunpack.c.l.s4 1934713408
        %v1900 = vunpack.c.0.s8 %v1899
        %v1901 = vlaneseq
        %v1902 = vshrl.u32 %v1901, 7
        %v1903 = vsub.s32 %v1900, %v1902
        %v1904 = vrot.slane %v1890, %v1903
        %v1905 = vcombine.low %v1872, %v1888
        %v1906 = vcombine.high %v1872, %v1888
        %v1908 = vunpack.c.l.s4 1934713408
        %v1909 = vunpack.c.0.s8 %v1908
        %v1910 = vlaneseq
        %v1911 = vshrl.u32 %v1910, 7
        %v1912 = vsub.s32 %v1909, %v1911
        %v1913 = vrot.slane %v1905, %v1912
        %v1915 = vunpack.c.l.s4 1934713408
        %v1916 = vunpack.c.0.s8 %v1915
        %v1917 = vlaneseq
        %v1918 = vshrl.u32 %v1917, 7
        %v1919 = vsub.s32 %v1916, %v1918
        %v1920 = vrot.slane %v1906, %v1919
        %v1921 = vcombine.high %v1897, 0.0
        %v1922 = vcombine.high %v1904, 0.0
        %v1923 = vcombine.high %v1913, 0.0
        %v1924 = vcombine.high %v1920, 0.0
        %v1925 = vcombine.low %v1897, %v1904
        %v1927 = vunpack.c.l.s4 1983009808
        %v1928 = vunpack.c.0.s8 %v1927
        %v1929 = vlaneseq
        %v1930 = vshrl.u32 %v1929, 7
        %v1931 = vsub.s32 %v1928, %v1930
        %v1932 = vrot.slane %v1925, %v1931
        %v1933 = vcombine.low %v1921, %v1922
        %v1935 = vunpack.c.l.s4 1983009808
        %v1936 = vunpack.c.0.s8 %v1935
        %v1937 = vlaneseq
        %v1938 = vshrl.u32 %v1937, 7
        %v1939 = vsub.s32 %v1936, %v1938
        %v1940 = vrot.slane %v1933, %v1939
        %v1941 = vcombine.low %v1913, %v1920
        %v1943 = vunpack.c.l.s4 1983009808
        %v1944 = vunpack.c.0.s8 %v1943
        %v1945 = vlaneseq
        %v1946 = vshrl.u32 %v1945, 7
        %v1947 = vsub.s32 %v1944, %v1946
        %v1948 = vrot.slane %v1941, %v1947
        %v1949 = vcombine.low %v1923, %v1924
        %v1951 = vunpack.c.l.s4 1983009808
        %v1952 = vunpack.c.0.s8 %v1951
        %v1953 = vlaneseq
        %v1954 = vshrl.u32 %v1953, 7
        %v1955 = vsub.s32 %v1952, %v1954
        %v1956 = vrot.slane %v1949, %v1955
        %v1957 = vcombine.low %v1932, %v1940
        %v1958 = vcombine.high %v1932, %v1940
        %v1960 = vunpack.c.l.s4 1934713408
        %v1961 = vunpack.c.0.s8 %v1960
        %v1962 = vlaneseq
        %v1963 = vshrl.u32 %v1962, 7
        %v1964 = vsub.s32 %v1961, %v1963
        %v1965 = vrot.slane %v1957, %v1964
        %v1967 = vunpack.c.l.s4 1934713408
        %v1968 = vunpack.c.0.s8 %v1967
        %v1969 = vlaneseq
        %v1970 = vshrl.u32 %v1969, 7
        %v1971 = vsub.s32 %v1968, %v1970
        %v1972 = vrot.slane %v1958, %v1971
        %v1973 = vcombine.low %v1948, %v1956
        %v1974 = vcombine.high %v1948, %v1956
        %v1976 = vunpack.c.l.s4 1934713408
        %v1977 = vunpack.c.0.s8 %v1976
        %v1978 = vlaneseq
        %v1979 = vshrl.u32 %v1978, 7
        %v1980 = vsub.s32 %v1977, %v1979
        %v1981 = vrot.slane %v1973, %v1980
        %v1983 = vunpack.c.l.s4 1934713408
        %v1984 = vunpack.c.0.s8 %v1983
        %v1985 = vlaneseq
        %v1986 = vshrl.u32 %v1985, 7
        %v1987 = vsub.s32 %v1984, %v1986
        %v1988 = vrot.slane %v1974, %v1987
        %v1989 = vcombine.low %v1965, %v1981
        %v1990 = vcombine.high %v1965, %v1981
        %v1991 = vcombine.low %v1972, %v1988
        %v1992 = vcombine.high %v1972, %v1988
        %1994 = vrot.lane.b32.xlu0 %v1990, 8
        %v1995 = vpop.permute.xlu0 %1994
        %1998 = vrot.lane.b32.xlu0 %v1991, 16
        %v1999 = vpop.permute.xlu0 %1998
        %2002 = vrot.lane.b32.xlu0 %v1992, 24
        %v2003 = vpop.permute.xlu0 %2002
        %v2005 = vsel %vm1212, %v1989, %v1995
        %vm2006 = vcmask 130048
        %v2007 = vsel %vm2006, %v2005, %v1999
        %vm2008 = vcmask 195584
        %v2009 = vsel %vm2008, %v2007, %v2003
        %v2010 = vld [vmem:[%s9] sm:$0xff]
        %v2011 = vld [vmem:[%s9 + $0x8] sm:$0xff]
        %v2012 = vld [vmem:[%s9 + $0x10] sm:$0xff]
        %v2013 = vld [vmem:[%s9 + $0x18] sm:$0xff]
        %v2014 = vld [vmem:[%s10] sm:$0x1]
        %v2016 = vlaneseq
        %v2017 = vshrl.u32 %v2016, 7
        %v2018 = vsub.s32 0, %v2017
        %v2019 = vrot.slane %v2014, %v2018
        %vm2021 = vcmask 261120
        %v2023 = vsel %vm2021, %v2009, 0
        %2025 = vmatprep.subr.mxu0 0.0
        %2026 = vmatpush1.msra.mxu0 %v2010
        %2027 = vmatprep.subr.mxu0 0.0
        %2028 = vmatpush1.msra.mxu0 %v2011
        %2029 = vmatprep.subr.mxu0 0.0
        %2030 = vmatpush1.msra.mxu0 %v2012
        %2031 = vmatprep.subr.mxu0 0.0
        %2032 = vmatpush1.msra.mxu0 %v2013
        %2033 = vmatprep.subr.mxu0 0.0
        %2034 = vmatpush1.msra.mxu0 0.0
        %2035 = vmatprep.subr.mxu0 0.0
        %2036 = vmatpush1.msra.mxu0 0.0
        %2037 = vmatprep.subr.mxu0 0.0
        %2038 = vmatpush1.msra.mxu0 0.0
        %2039 = vmatprep.subr.mxu0 0.0
        %2040 = vmatpush1.msra.mxu0 0.0
        %2041 = vmatprep.subr.mxu0 0.0
        %2042 = vmatpush1.msra.mxu0 0.0
        %2043 = vmatprep.subr.mxu0 0.0
        %2044 = vmatpush1.msra.mxu0 0.0
        %2045 = vmatprep.subr.mxu0 0.0
        %2046 = vmatpush1.msra.mxu0 0.0
        %2047 = vmatprep.subr.mxu0 0.0
        %2048 = vmatpush1.msra.mxu0 0.0
        %2049 = vmatprep.subr.mxu0 0.0
        %2050 = vmatpush1.msra.mxu0 0.0
        %2051 = vmatprep.subr.mxu0 0.0
        %2052 = vmatpush1.msra.mxu0 0.0
        %2053 = vmatprep.subr.mxu0 0.0
        %2054 = vmatpush1.msra.mxu0 0.0
        %2055 = vmatprep.subr.mxu0 0.0
        %2056 = vmatpush1.msra.mxu0 0.0
        %2057 = vmatprep.subr.mxu0 0.0
        %2058 = vmatpush1.msra.mxu0 0.0
        %2059 = vmatprep.subr.mxu0 0.0
        %2060 = vmatpush1.msra.mxu0 0.0
        %2061 = vmatprep.subr.mxu0 0.0
        %2062 = vmatpush1.msra.mxu0 0.0
        %2063 = vmatprep.subr.mxu0 0.0
        %2064 = vmatpush1.msra.mxu0 0.0
        %2065 = vmatprep.subr.mxu0 0.0
        %2066 = vmatpush1.msra.mxu0 0.0
        %2067 = vmatprep.subr.mxu0 0.0
        %2068 = vmatpush1.msra.mxu0 0.0
        %2069 = vmatprep.subr.mxu0 0.0
        %2070 = vmatpush1.msra.mxu0 0.0
        %2071 = vmatprep.subr.mxu0 0.0
        %2072 = vmatpush1.msra.mxu0 0.0
        %2073 = vmatprep.subr.mxu0 0.0
        %2074 = vmatpush1.msra.mxu0 0.0
        %2075 = vmatprep.subr.mxu0 0.0
        %2076 = vmatpush1.msra.mxu0 0.0
        %2077 = vmatprep.subr.mxu0 0.0
        %2078 = vmatpush1.msra.mxu0 0.0
        %2079 = vmatprep.subr.mxu0 0.0
        %2080 = vmatpush1.msra.mxu0 0.0
        %2081 = vmatprep.subr.mxu0 0.0
        %2082 = vmatpush1.msra.mxu0 0.0
        %2083 = vmatprep.subr.mxu0 0.0
        %2084 = vmatpush1.msra.mxu0 0.0
        %2085 = vmatprep.subr.mxu0 0.0
        %2086 = vmatpush1.msra.mxu0 0.0
        %2087 = vmatprep.subr.mxu0 0.0
        %2088 = vmatpush1.msra.mxu0 0.0
        %2089 = vmatprep.mubr.f32.mxu0 0.0
        %2090 = vmatmul.mubr.f32.gmra.mrb[0].mxu0 %v2023
        %v2091 = vpop.f32.mrb[0].mxu0
        %v2092 = vadd.f32 %v2019, %v2091
        %v2093 = vpop.f32.mrb[0].mxu0
        %2094 = vdwg.mxu0
        %v2095 = vadd.f32 %v2092, %v492
        %2096 = vadd.xlane.f32.xlu0 %v2095
        %v2097 = vpop.xlane.xlu0 %2096
        %v2098 = vmul.f32 %v2097, 0.03125
        %v2099 = vsub.f32 %v2095, %v2098
        %v2100 = vlaneseq
        %v2101 = vand.u32 %v2100, 127
        %vm2102 = vcmp.lt.s32.totalorder %v2101, 32
        %v2103 = vsel %vm2102, %v2099, 0.0
        %v2104 = vmul.f32 %v2103, %v2103
        %2105 = vadd.xlane.f32.xlu0 %v2104
        %v2106 = vpop.xlane.xlu0 %2105
        %v2107 = vmul.f32 %v2106, 0.03125
        %v2108 = vadd.f32 %v2107, 1e-05
        %v2109 = vrsqrt.pop %v2108
        %v2110 = vmul.f32 %v2103, %v2109
        %v2111 = vld [vmem:[%s11] sm:$0x1]
        %v2113 = vlaneseq
        %v2114 = vshrl.u32 %v2113, 7
        %v2115 = vsub.s32 0, %v2114
        %v2116 = vrot.slane %v2111, %v2115
        %v2118 = vmul.f32 %v2110, %v2116
        %v2119 = vld [vmem:[%s12] sm:$0x1]
        %v2121 = vlaneseq
        %v2122 = vshrl.u32 %v2121, 7
        %v2123 = vsub.s32 0, %v2122
        %v2124 = vrot.slane %v2119, %v2123
        %v2126 = vadd.f32 %v2118, %v2124
        %2127 = vst [vmem:[%s476] sm:$0xff] %v2126
        %s2128 = sand.u32 %s339, 1
        %s2129 = scalar_lea.sflag [#allocation3], %s2128
        %s2130 = sand.u32 %s339, 1
        %s2131 = smul.addr %s2130, 8
        %s2132 = scalar_lea.vmem [#allocation2], %s2131
        // Predicated region
        $region73: #{tpu_custom_call.1} parent=71 // pred_check
          %p2133 = pneg %p349
        $region74: #{tpu_custom_call.1} parent=71 // pred_check_branch
          %2135 = sbr.rel (%p2133) target = $region76
        $region75: #{tpu_custom_call.1} parent=71 // pred_region
          %s2136 = sadd.s32 %s31, %s32
          %s2138 = ssub.s32 128, 128
          %2139 = vsyncadd %s2129, %s2138
          %s2140 = smul.addr %s2136, 128
          %s2141 = scalar_lea.hbm %s13, %s2140
          %s2143 = sshll.u32 %s2132, 4
          %s2144 = int_to_ptr.vmem [resolvable:$true] %s2143
          %2146 = dma.vmem_to_hbm [thread:$0]  %s2144, 128, %s2141, %s2129
        $region76: #{tpu_custom_call.1} parent=71 // pred_fallthru
          _
      $region72: #{tpu_custom_call.1} parent=5 // pred_fallthru
        _
      %p2147 = scmp.le.s32.totalorder 2, %s22
      // Predicated region
      $region77: #{tpu_custom_call.1} parent=5 // pred_check
        %p2148 = pneg %p2147
      $region78: #{tpu_custom_call.1} parent=5 // pred_check_branch
        %2150 = sbr.rel (%p2148) target = $region80
      $region79: #{tpu_custom_call.1} parent=5 // pred_region
        %s2151 = ssub.s32 %s22, 2
        // Predicated region
        $region81: #{tpu_custom_call.1} parent=79 // pred_check
          %p2152 = pneg %p355
        $region82: #{tpu_custom_call.1} parent=79 // pred_check_branch
          %2154 = sbr.rel (%p2152) target = $region84
        $region83: #{tpu_custom_call.1} parent=79 // pred_region
          %s2155 = sand.u32 %s340, 1
          %s2156 = scalar_lea.sflag [#allocation3], %s2155
          %s2157 = sand.u32 %s340, 1
          %s2158 = smul.addr %s2157, 8
          %s2159 = scalar_lea.vmem [#allocation2], %s2158
          %2160 = dma.done %s2156, 128
        $region84: #{tpu_custom_call.1} parent=79 // pred_fallthru
          _
      $region80: #{tpu_custom_call.1} parent=5 // pred_fallthru
        _
    $region6: #{tpu_custom_call.1} parent=1 // loop_footer
      %s26 = sadd.s32 1, %s22
    $region7: #{tpu_custom_call.1} parent=1 // loop_footer_branch
      %21 = sbr.rel target = $region3
    $region8: #{tpu_custom_call.1} parent=1 // loop_exit
      _
    %2161 = vsyncpa [#allocation3], 1
    %s2162 = scalar_lea.sflag [#allocation3], 1
    %2163 = vsyncpa %s2162, 1

</llo_original>
